<compile_context>
chip_gen: v7x
topology: tpu7x:2x2x1
jax: 0.10.0
libtpu: 0.0.40
codegen_flags: <defaults>
</compile_context>

<pallas_src>
import jax
import jax.numpy as jnp
from jax.experimental import pallas as pl
from jax.experimental.pallas import tpu as pltpu

# ---------------- model dimensions (consistent with the module) --------------
BATCH = 128                            # fills MXU rows; still "small" (98 KB obs)
ONE_OBS_LEN = 48                       # actor[0].in_features - latent_len
HIST = 4
OBS_LEN = ONE_OBS_LEN * HIST           # encoder[0].in_features = 192
ENC_H0, ENC_H1 = 128, 64               # encoder MLP hidden sizes
VEL_DIM = 3                            # encode_vel.out_features
LATENT_DIM = 16                        # encode_latent.out_features
LATENT_LEN = VEL_DIM + LATENT_DIM      # 19
ACTOR_IN = LATENT_LEN + ONE_OBS_LEN    # 67
A_H0, A_H1 = 64, 32                    # actor hidden sizes
NUM_ACTIONS = 12
OUT_DIM = NUM_ACTIONS + VEL_DIM        # logical fused output: [actions|vel] = 15
OUT_PAD = 128                          # lane-dense padded output width
NORM_EPS = 1e-8

MIX_LANES = ENC_H0 + A_H0              # 192: [enc-l0 pre-act | actor-l0 now_obs]

# ------------- single packed weight/bias slab: (136, 640) f32 ----------------
SLAB_ROWS, SLAB_LANES = 136, 640
# weight lane offsets (all 128-aligned), weights live in rows [0, 128)
OFF_EW1 = 0        # (128, 64)  encoder layer 1
OFF_WXA = 128      # (64, 64)   heads fused into actor layer 0 (code branch)
OFF_AW1 = 256      # (64, 32)   actor layer 1
OFF_VW = 384       # (64, 128)  vel head, padded to output lanes [12,15)
OFF_AW2 = 512      # (32, 128)  actor output, padded to output lanes [0,12)
# biases live in row 128 (8-aligned sublane offset), 128-aligned lane offsets
BIAS_ROW = 128
B_EB0, B_EB1, B_AB0, B_AB1, B_OUT = 0, 128, 256, 384, 512

# batch grid block (only used when batch > 256; v7x megacore sharding)
BATCH_BLOCK = 128


def _elu(x):
    # Clamp the argument of the negative branch so the discarded where() arm
    # never produces inf.
    return jnp.where(x > 0.0, x, jnp.exp(jnp.minimum(x, 0.0)) - 1.0)


# ------------------------------- kernel --------------------------------------
def estnet_kernel(obs_ref, win_ref, slab_ref, out_ref):
    obs = obs_ref[...]                                           # (B, 192)

    # Fused "input mix": lanes [0,128) = encoder layer-0 pre-activation
    # (normalizer folded in), lanes [128,192) = now_obs contribution to actor
    # layer 0 (normalizer folded, zero rows for non-now_obs features).
    mix = jnp.dot(obs, win_ref[...], preferred_element_type=jnp.float32)

    # zero-cost static slices out of the packed slab
    eb0 = slab_ref[BIAS_ROW:BIAS_ROW + 1, B_EB0:B_EB0 + ENC_H0]
    eb1 = slab_ref[BIAS_ROW:BIAS_ROW + 1, B_EB1:B_EB1 + ENC_H1]
    ab0 = slab_ref[BIAS_ROW:BIAS_ROW + 1, B_AB0:B_AB0 + A_H0]
    ab1 = slab_ref[BIAS_ROW:BIAS_ROW + 1, B_AB1:B_AB1 + A_H1]
    b_out = slab_ref[BIAS_ROW:BIAS_ROW + 1, B_OUT:B_OUT + OUT_PAD]

    ew1 = slab_ref[:ENC_H0, OFF_EW1:OFF_EW1 + ENC_H1]            # (128, 64)
    wxa = slab_ref[:ENC_H1, OFF_WXA:OFF_WXA + A_H0]              # (64, 64)
    aw1 = slab_ref[:A_H0, OFF_AW1:OFF_AW1 + A_H1]                # (64, 32)
    vw_out = slab_ref[:ENC_H1, OFF_VW:OFF_VW + OUT_PAD]          # (64, 128)
    aw2_out = slab_ref[:A_H1, OFF_AW2:OFF_AW2 + OUT_PAD]         # (32, 128)

    x = _elu(mix[:, :ENC_H0] + eb0)
    x = _elu(jnp.dot(x, ew1, preferred_element_type=jnp.float32) + eb1)  # (B,64)

    # actor layer 0: code branch fused as x @ (heads @ aw0[:19]); now_obs branch
    # already sits in mix[:, 128:]; all biases (incl. head biases) pre-folded.
    h = _elu(jnp.dot(x, wxa, preferred_element_type=jnp.float32)
             + mix[:, ENC_H0:] + ab0)
    h = _elu(jnp.dot(h, aw1, preferred_element_type=jnp.float32) + ab1)

    # lane-dense fused output: lanes [0,12) actions_mean, [12,15) vel, rest 0.
    out_ref[...] = (jnp.dot(h, aw2_out, preferred_element_type=jnp.float32)
                    + jnp.dot(x, vw_out, preferred_element_type=jnp.float32)
                    + b_out)


# ------------------------------ wrapper ---------------------------------------
@jax.jit
def estnet_forward(obs, packed):
    w_in, slab = packed
    rows = obs.shape[0]
    out_shape = jax.ShapeDtypeStruct((rows, OUT_PAD), jnp.float32)

    if rows <= 256 or rows % BATCH_BLOCK != 0:
        # Small batch: grid-less, everything VMEM-resident (v5e/v6e-friendly;
        # ~0.35 us per grid step would dominate here).
        vmem = pl.BlockSpec(memory_space=pltpu.MemorySpace.VMEM)
        out = pl.pallas_call(
            estnet_kernel,
            out_shape=out_shape,
            in_specs=[vmem, vmem, vmem],
            out_specs=vmem,
        )(obs, w_in, slab)
    else:
        # Large batch: parallel 1-D grid over batch blocks so v7x's second
        # TensorCore gets half the rows; weights map to the same block each
        # step (no re-fetch).
        grid = (rows // BATCH_BLOCK,)
        out = pl.pallas_call(
            estnet_kernel,
            out_shape=out_shape,
            grid=grid,
            in_specs=[
                pl.BlockSpec((BATCH_BLOCK, OBS_LEN), lambda i: (i, 0)),
                pl.BlockSpec((OBS_LEN, MIX_LANES), lambda i: (0, 0)),
                pl.BlockSpec((SLAB_ROWS, SLAB_LANES), lambda i: (0, 0)),
            ],
            out_specs=pl.BlockSpec((BATCH_BLOCK, OUT_PAD), lambda i: (i, 0)),
            compiler_params=pltpu.CompilerParams(
                dimension_semantics=("parallel",)),
        )(obs, w_in, slab)

    return out[:, :NUM_ACTIONS], out[:, NUM_ACTIONS:NUM_ACTIONS + VEL_DIM]


# ------------------------ one-time parameter repacking ------------------------
def pack_params(raw):
    """Fold normalizer, fuse heads/actor-layer-0, pack everything else into one
    (136, 640) slab. Run ONCE, outside the per-call jit path."""
    (nmean, nstd, ew0, eb0, ew1, eb1, vw, vb, lw, lb,
     aw0, ab0, aw1, ab1, aw2, ab2) = raw

    inv_std = 1.0 / (nstd + NORM_EPS)                      # (1, 192)

    # encoder layer 0 with the normalizer folded in
    ew0_f = ew0 * inv_std.reshape(-1, 1)                   # (192, 128)
    eb0_f = eb0 - (nmean * inv_std) @ ew0                  # (1, 128)

    # actor layer 0, split over [code | now_obs]
    aw0c = aw0[:LATENT_LEN]                                # (19, 64)
    aw0o = aw0[LATENT_LEN:]                                # (48, 64)

    # now_obs branch: fold normalizer, zero-pad to all 192 obs features
    inv_o = inv_std[:, OBS_LEN - ONE_OBS_LEN:]             # (1, 48)
    mean_o = nmean[:, OBS_LEN - ONE_OBS_LEN:]              # (1, 48)
    aw0o_full = jnp.zeros((OBS_LEN, A_H0), jnp.float32)
    aw0o_full = aw0o_full.at[OBS_LEN - ONE_OBS_LEN:].set(aw0o * inv_o.reshape(-1, 1))

    # single obs-sided matmul: [encoder-l0 | actor-l0 now_obs term]
    w_in = jnp.concatenate([ew0_f, aw0o_full], axis=1)     # (192, 192)

    # code branch of actor layer 0 fused through the (vel|latent) heads
    hw = jnp.concatenate([vw, lw], axis=1)                 # (64, 19)
    hb = jnp.concatenate([vb, lb], axis=1)                 # (1, 19)
    wxa = hw @ aw0c                                        # (64, 64)
    ab0_f = ab0 + hb @ aw0c - (mean_o * inv_o) @ aw0o      # (1, 64)

    # single packed slab: weights in rows [0,128), biases in row 128, all lane
    # offsets 128-aligned; output head padded to 128 lanes (lane-dense store).
    slab = jnp.zeros((SLAB_ROWS, SLAB_LANES), jnp.float32)
    slab = slab.at[:ENC_H0, OFF_EW1:OFF_EW1 + ENC_H1].set(ew1)
    slab = slab.at[:ENC_H1, OFF_WXA:OFF_WXA + A_H0].set(wxa)
    slab = slab.at[:A_H0, OFF_AW1:OFF_AW1 + A_H1].set(aw1)
    slab = slab.at[:ENC_H1, OFF_VW + NUM_ACTIONS:OFF_VW + OUT_DIM].set(vw)
    slab = slab.at[:A_H1, OFF_AW2:OFF_AW2 + NUM_ACTIONS].set(aw2)
    slab = slab.at[BIAS_ROW, B_EB0:B_EB0 + ENC_H0].set(eb0_f[0])
    slab = slab.at[BIAS_ROW, B_EB1:B_EB1 + ENC_H1].set(eb1[0])
    slab = slab.at[BIAS_ROW, B_AB0:B_AB0 + A_H0].set(ab0_f[0])
    slab = slab.at[BIAS_ROW, B_AB1:B_AB1 + A_H1].set(ab1[0])
    slab = slab.at[BIAS_ROW, B_OUT:B_OUT + NUM_ACTIONS].set(ab2[0])
    slab = slab.at[BIAS_ROW, B_OUT + NUM_ACTIONS:B_OUT + OUT_DIM].set(vb[0])

    return (w_in, slab)


# --------------------------- deterministic raw params -------------------------
def init_params(key):
    def linear(k, fan_in, fan_out):
        kw, kb = jax.random.split(k)
        bound = 1.0 / jnp.sqrt(jnp.float32(fan_in))
        w = jax.random.uniform(kw, (fan_in, fan_out), jnp.float32, -bound, bound)
        b = jax.random.uniform(kb, (1, fan_out), jnp.float32, -bound, bound)
        return w, b

    keys = jax.random.split(key, 9)
    nmean = jax.random.normal(keys[0], (1, OBS_LEN), jnp.float32) * 0.1
    nstd = jnp.abs(jax.random.normal(keys[1], (1, OBS_LEN), jnp.float32)) + 0.5
    ew0, eb0 = linear(keys[2], OBS_LEN, ENC_H0)
    ew1, eb1 = linear(keys[3], ENC_H0, ENC_H1)
    vw, vb = linear(keys[4], ENC_H1, VEL_DIM)
    lw, lb = linear(keys[5], ENC_H1, LATENT_DIM)
    aw0, ab0 = linear(keys[6], ACTOR_IN, A_H0)
    aw1, ab1 = linear(keys[7], A_H0, A_H1)
    aw2, ab2 = linear(keys[8], A_H1, NUM_ACTIONS)
    return (nmean, nstd, ew0, eb0, ew1, eb1, vw, vb, lw, lb,
            aw0, ab0, aw1, ab1, aw2, ab2)


# ------------------------------ pure-JAX reference -----------------------------
def reference_forward(obs, raw):
    (nmean, nstd, ew0, eb0, ew1, eb1, vw, vb, lw, lb,
     aw0, ab0, aw1, ab1, aw2, ab2) = raw
    obs_n = (obs - nmean) / (nstd + NORM_EPS)
    x = jax.nn.elu(obs_n @ ew0 + eb0)
    x = jax.nn.elu(x @ ew1 + eb1)
    vel = x @ vw + vb
    latent = x @ lw + lb
    code = jnp.concatenate([vel, latent], axis=-1)
    now_obs = obs_n[:, -ONE_OBS_LEN:]
    observations = jnp.concatenate([code, now_obs], axis=-1)
    h = jax.nn.elu(observations @ aw0 + ab0)
    h = jax.nn.elu(h @ aw1 + ab1)
    actions = h @ aw2 + ab2
    return actions, vel


if __name__ == "__main__":
    key = jax.random.PRNGKey(0)
    kobs, kobs2, kpar = jax.random.split(key, 3)

    raw = init_params(kpar)
    packed = pack_params(raw)          # one-time repack, outside the jit path

    # ---- small batch: grid-less path (all generations) ----
    obs = jax.random.normal(kobs, (BATCH, OBS_LEN), jnp.float32)
    actions_mean, mean_vel = estnet_forward(obs, packed)
    jax.block_until_ready((actions_mean, mean_vel))

    ref_actions, ref_vel = reference_forward(obs, raw)
    assert actions_mean.shape == (BATCH, NUM_ACTIONS)
    assert mean_vel.shape == (BATCH, VEL_DIM)
    assert jnp.allclose(actions_mean, ref_actions, atol=1e-4, rtol=1e-4)
    assert jnp.allclose(mean_vel, ref_vel, atol=1e-4, rtol=1e-4)

    # ---- large batch: parallel batch-grid path (v7x second TensorCore) ----
    big = 4 * BATCH_BLOCK
    obs2 = jax.random.normal(kobs2, (big, OBS_LEN), jnp.float32)
    actions2, vel2 = estnet_forward(obs2, packed)
    jax.block_until_ready((actions2, vel2))

    ref_a2, ref_v2 = reference_forward(obs2, raw)
    assert actions2.shape == (big, NUM_ACTIONS)
    assert vel2.shape == (big, VEL_DIM)
    assert jnp.allclose(actions2, ref_a2, atol=1e-4, rtol=1e-4)
    assert jnp.allclose(vel2, ref_v2, atol=1e-4, rtol=1e-4)

    print("KERNEL_OK")
</pallas_src>

<mosaic_0001>
module attributes {stable_mosaic.version = 11 : i64} {
  func.func @estnet_kernel(%arg0: memref<128x192xf32, #tpu.memory_space<vmem>>, %arg1: memref<192x192xf32, #tpu.memory_space<vmem>>, %arg2: memref<136x640xf32, #tpu.memory_space<vmem>>, %arg3: memref<128x128xf32, #tpu.memory_space<vmem>>) attributes {dimension_semantics = [], scalar_prefetch = 0 : i64, scratch_operands = 0 : i64, tpu.core_type = #tpu.core_type<tc>} {
    %c0 = arith.constant 0 : index
    %c0_0 = arith.constant 0 : index
    %0 = vector.load %arg0[%c0, %c0_0] : memref<128x192xf32, #tpu.memory_space<vmem>>, vector<128x192xf32>
    %c0_1 = arith.constant 0 : index
    %c0_2 = arith.constant 0 : index
    %1 = vector.load %arg1[%c0_1, %c0_2] : memref<192x192xf32, #tpu.memory_space<vmem>>, vector<192x192xf32>
    %cst = arith.constant dense<0.000000e+00> : vector<128x192xf32>
    %2 = tpu.matmul %0, %1, %cst {dimension_numbers = #tpu.dot_dimension_numbers<[1], [0], [0], [1], [0, 0, 1, 1], [], []>} : vector<128x192xf32>, vector<192x192xf32>, vector<128x192xf32> -> vector<128x192xf32>
    %c128 = arith.constant 128 : index
    %c0_3 = arith.constant 0 : index
    %3 = vector.load %arg2[%c128, %c0_3] : memref<136x640xf32, #tpu.memory_space<vmem>>, vector<1x128xf32>
    %c128_4 = arith.constant 128 : index
    %c128_5 = arith.constant 128 : index
    %4 = vector.load %arg2[%c128_4, %c128_5] : memref<136x640xf32, #tpu.memory_space<vmem>>, vector<1x64xf32>
    %c128_6 = arith.constant 128 : index
    %c256 = arith.constant 256 : index
    %5 = vector.load %arg2[%c128_6, %c256] : memref<136x640xf32, #tpu.memory_space<vmem>>, vector<1x64xf32>
    %c128_7 = arith.constant 128 : index
    %c384 = arith.constant 384 : index
    %6 = vector.load %arg2[%c128_7, %c384] : memref<136x640xf32, #tpu.memory_space<vmem>>, vector<1x32xf32>
    %c128_8 = arith.constant 128 : index
    %c512 = arith.constant 512 : index
    %7 = vector.load %arg2[%c128_8, %c512] : memref<136x640xf32, #tpu.memory_space<vmem>>, vector<1x128xf32>
    %c0_9 = arith.constant 0 : index
    %c0_10 = arith.constant 0 : index
    %8 = vector.load %arg2[%c0_9, %c0_10] : memref<136x640xf32, #tpu.memory_space<vmem>>, vector<128x64xf32>
    %c0_11 = arith.constant 0 : index
    %c128_12 = arith.constant 128 : index
    %9 = vector.load %arg2[%c0_11, %c128_12] : memref<136x640xf32, #tpu.memory_space<vmem>>, vector<64x64xf32>
    %c0_13 = arith.constant 0 : index
    %c256_14 = arith.constant 256 : index
    %10 = vector.load %arg2[%c0_13, %c256_14] : memref<136x640xf32, #tpu.memory_space<vmem>>, vector<64x32xf32>
    %c0_15 = arith.constant 0 : index
    %c384_16 = arith.constant 384 : index
    %11 = vector.load %arg2[%c0_15, %c384_16] : memref<136x640xf32, #tpu.memory_space<vmem>>, vector<64x128xf32>
    %c0_17 = arith.constant 0 : index
    %c512_18 = arith.constant 512 : index
    %12 = vector.load %arg2[%c0_17, %c512_18] : memref<136x640xf32, #tpu.memory_space<vmem>>, vector<32x128xf32>
    %13 = vector.extract_strided_slice %2 {offsets = [0, 0], sizes = [128, 128], strides = [1, 1]} : vector<128x192xf32> to vector<128x128xf32>
    %14 = vector.broadcast %3 : vector<1x128xf32> to vector<128x128xf32>
    %15 = arith.addf %13, %14 : vector<128x128xf32>
    %cst_19 = arith.constant 0.000000e+00 : f32
    %16 = vector.broadcast %cst_19 : f32 to vector<128x128xf32>
    %17 = arith.cmpf ogt, %15, %16 : vector<128x128xf32>
    %cst_20 = arith.constant 0.000000e+00 : f32
    %18 = vector.broadcast %cst_20 : f32 to vector<128x128xf32>
    %19 = arith.minimumf %15, %18 : vector<128x128xf32>
    %20 = math.exp %19 : vector<128x128xf32>
    %cst_21 = arith.constant 1.000000e+00 : f32
    %21 = vector.broadcast %cst_21 : f32 to vector<128x128xf32>
    %22 = arith.subf %20, %21 : vector<128x128xf32>
    %23 = arith.select %17, %15, %22 : vector<128x128xi1>, vector<128x128xf32>
    %cst_22 = arith.constant dense<0.000000e+00> : vector<128x64xf32>
    %24 = tpu.matmul %23, %8, %cst_22 {dimension_numbers = #tpu.dot_dimension_numbers<[1], [0], [0], [1], [0, 0, 1, 1], [], []>} : vector<128x128xf32>, vector<128x64xf32>, vector<128x64xf32> -> vector<128x64xf32>
    %25 = vector.broadcast %4 : vector<1x64xf32> to vector<128x64xf32>
    %26 = arith.addf %24, %25 : vector<128x64xf32>
    %cst_23 = arith.constant 0.000000e+00 : f32
    %27 = vector.broadcast %cst_23 : f32 to vector<128x64xf32>
    %28 = arith.cmpf ogt, %26, %27 : vector<128x64xf32>
    %cst_24 = arith.constant 0.000000e+00 : f32
    %29 = vector.broadcast %cst_24 : f32 to vector<128x64xf32>
    %30 = arith.minimumf %26, %29 : vector<128x64xf32>
    %31 = math.exp %30 : vector<128x64xf32>
    %cst_25 = arith.constant 1.000000e+00 : f32
    %32 = vector.broadcast %cst_25 : f32 to vector<128x64xf32>
    %33 = arith.subf %31, %32 : vector<128x64xf32>
    %34 = arith.select %28, %26, %33 : vector<128x64xi1>, vector<128x64xf32>
    %cst_26 = arith.constant dense<0.000000e+00> : vector<128x64xf32>
    %35 = tpu.matmul %34, %9, %cst_26 {dimension_numbers = #tpu.dot_dimension_numbers<[1], [0], [0], [1], [0, 0, 1, 1], [], []>} : vector<128x64xf32>, vector<64x64xf32>, vector<128x64xf32> -> vector<128x64xf32>
    %36 = vector.extract_strided_slice %2 {offsets = [0, 128], sizes = [128, 64], strides = [1, 1]} : vector<128x192xf32> to vector<128x64xf32>
    %37 = arith.addf %35, %36 : vector<128x64xf32>
    %38 = vector.broadcast %5 : vector<1x64xf32> to vector<128x64xf32>
    %39 = arith.addf %37, %38 : vector<128x64xf32>
    %cst_27 = arith.constant 0.000000e+00 : f32
    %40 = vector.broadcast %cst_27 : f32 to vector<128x64xf32>
    %41 = arith.cmpf ogt, %39, %40 : vector<128x64xf32>
    %cst_28 = arith.constant 0.000000e+00 : f32
    %42 = vector.broadcast %cst_28 : f32 to vector<128x64xf32>
    %43 = arith.minimumf %39, %42 : vector<128x64xf32>
    %44 = math.exp %43 : vector<128x64xf32>
    %cst_29 = arith.constant 1.000000e+00 : f32
    %45 = vector.broadcast %cst_29 : f32 to vector<128x64xf32>
    %46 = arith.subf %44, %45 : vector<128x64xf32>
    %47 = arith.select %41, %39, %46 : vector<128x64xi1>, vector<128x64xf32>
    %cst_30 = arith.constant dense<0.000000e+00> : vector<128x32xf32>
    %48 = tpu.matmul %47, %10, %cst_30 {dimension_numbers = #tpu.dot_dimension_numbers<[1], [0], [0], [1], [0, 0, 1, 1], [], []>} : vector<128x64xf32>, vector<64x32xf32>, vector<128x32xf32> -> vector<128x32xf32>
    %49 = vector.broadcast %6 : vector<1x32xf32> to vector<128x32xf32>
    %50 = arith.addf %48, %49 : vector<128x32xf32>
    %cst_31 = arith.constant 0.000000e+00 : f32
    %51 = vector.broadcast %cst_31 : f32 to vector<128x32xf32>
    %52 = arith.cmpf ogt, %50, %51 : vector<128x32xf32>
    %cst_32 = arith.constant 0.000000e+00 : f32
    %53 = vector.broadcast %cst_32 : f32 to vector<128x32xf32>
    %54 = arith.minimumf %50, %53 : vector<128x32xf32>
    %55 = math.exp %54 : vector<128x32xf32>
    %cst_33 = arith.constant 1.000000e+00 : f32
    %56 = vector.broadcast %cst_33 : f32 to vector<128x32xf32>
    %57 = arith.subf %55, %56 : vector<128x32xf32>
    %58 = arith.select %52, %50, %57 : vector<128x32xi1>, vector<128x32xf32>
    %cst_34 = arith.constant dense<0.000000e+00> : vector<128x128xf32>
    %59 = tpu.matmul %58, %12, %cst_34 {dimension_numbers = #tpu.dot_dimension_numbers<[1], [0], [0], [1], [0, 0, 1, 1], [], []>} : vector<128x32xf32>, vector<32x128xf32>, vector<128x128xf32> -> vector<128x128xf32>
    %cst_35 = arith.constant dense<0.000000e+00> : vector<128x128xf32>
    %60 = tpu.matmul %34, %11, %cst_35 {dimension_numbers = #tpu.dot_dimension_numbers<[1], [0], [0], [1], [0, 0, 1, 1], [], []>} : vector<128x64xf32>, vector<64x128xf32>, vector<128x128xf32> -> vector<128x128xf32>
    %61 = arith.addf %59, %60 : vector<128x128xf32>
    %62 = vector.broadcast %7 : vector<1x128xf32> to vector<128x128xf32>
    %63 = arith.addf %61, %62 : vector<128x128xf32>
    %c0_36 = arith.constant 0 : index
    %c0_37 = arith.constant 0 : index
    %64 = vector.load %arg3[%c0_36, %c0_37] : memref<128x128xf32, #tpu.memory_space<vmem>>, vector<128x128xf32>
    tpu.vector_store %arg3[%c0_36, %c0_37], %63 {strides = array<i32>} : memref<128x128xf32, #tpu.memory_space<vmem>>, vector<128x128xf32>,
    return
  }
}

</mosaic_0001>

<llo_original>
// kernel: estnet_forward.1
$region0: #{estnet_forward.1}
  #allocation0 [shape = 'u32[]', space=smem, size = 0x4, offset = 0x4, fixed_abs, tag = 'smem constant byte address 0x4 - core index']
  #allocation1 [shape = 'u32[144,128]{1,0:T(1,128)}', space=vmem, size = 0x12000, scoped, tag = 'internal scratch']
  %s0 = inlined_call_operand.vmem [shape: f32[128,192], index: 0, kind: input, shape index: {}]
  %s1 = inlined_call_operand.vmem [shape: f32[192,192], index: 1, kind: input, shape index: {}]
  %s2 = inlined_call_operand.hbm [shape: f32[136,640], index: 2, kind: input, shape index: {}]
  %s3 = inlined_call_operand.vmem [shape: f32[128,128], index: 3, kind: output, shape index: {}]
  %s4 = sld [smem:[#allocation0]]
  $region26: #{estnet_forward.1} parent=0
    _
  %s6 = ssub.s32 1, %s4
  %s7 = scalar_select 0, %s6, %s4
  $region1: #{estnet_forward.1} parent=0
    #allocation2 [shape = 'u8[348160]{0}', space=vmem, size = 0x55000, scoped, tag = 'input window, operand 2, single buffered']
    #allocation3 [shape = 's32[1]{0}', space=sflag, size = 0x4, scoped, tag = 'scoped memory for estnet_forward.1']
    %8 = vsyncpa [#allocation3], 0
    // Predicated region
    $region2: #{estnet_forward.1} parent=1 // pred_check
      _
    $region3: #{estnet_forward.1} parent=1 // pred_check_branch
      %10 = sbr.rel (0) target = $region5
    $region4: #{estnet_forward.1} parent=1 // pred_region
      _
    $region5: #{estnet_forward.1} parent=1 // pred_fallthru
      _
    // Predicated region
    $region6: #{estnet_forward.1} parent=1 // pred_check
      _
    $region7: #{estnet_forward.1} parent=1 // pred_check_branch
      %12 = sbr.rel (0) target = $region9
    $region8: #{estnet_forward.1} parent=1 // pred_region
      _
    $region9: #{estnet_forward.1} parent=1 // pred_fallthru
      _
    // Predicated region
    $region10: #{estnet_forward.1} parent=1 // pred_check
      _
    $region11: #{estnet_forward.1} parent=1 // pred_check_branch
      %14 = sbr.rel (0) target = $region13
    $region12: #{estnet_forward.1} parent=1 // pred_region
      %s16 = ssub.s32 10880, 10880
      %17 = vsyncadd [#allocation3], %s16
      %s18 = sshll.u32 [#allocation2], 4
      %s19 = int_to_ptr.vmem [resolvable:$true] %s18
      %24 = dma.hbm_to_vmem [thread:$0]  %s2, 10880, %s19, [#allocation3], 640, 640, 40
    $region13: #{estnet_forward.1} parent=1 // pred_fallthru
      _
    // Predicated region
    $region14: #{estnet_forward.1} parent=1 // pred_check
      _
    $region15: #{estnet_forward.1} parent=1 // pred_check_branch
      %26 = sbr.rel (0) target = $region17
    $region16: #{estnet_forward.1} parent=1 // pred_region
      %27 = dma.done [#allocation3], 10880
    $region17: #{estnet_forward.1} parent=1 // pred_fallthru
      _
    %v28 = vld [vmem:[%s0] sm:$0xff]
    %v29 = vld [vmem:[%s0 + $0x8] sm:$0xff]
    %v30 = vld [vmem:[%s0 + $0x10] sm:$0xff]
    %v31 = vld [vmem:[%s0 + $0x18] sm:$0xff]
    %v32 = vld [vmem:[%s0 + $0x20] sm:$0xff]
    %v33 = vld [vmem:[%s0 + $0x28] sm:$0xff]
    %v34 = vld [vmem:[%s0 + $0x30] sm:$0xff]
    %v35 = vld [vmem:[%s0 + $0x38] sm:$0xff]
    %v36 = vld [vmem:[%s0 + $0x40] sm:$0xff]
    %v37 = vld [vmem:[%s0 + $0x48] sm:$0xff]
    %v38 = vld [vmem:[%s0 + $0x50] sm:$0xff]
    %v39 = vld [vmem:[%s0 + $0x58] sm:$0xff]
    %v40 = vld [vmem:[%s0 + $0x60] sm:$0xff]
    %v41 = vld [vmem:[%s0 + $0x68] sm:$0xff]
    %v42 = vld [vmem:[%s0 + $0x70] sm:$0xff]
    %v43 = vld [vmem:[%s0 + $0x78] sm:$0xff]
    %v44 = vld [vmem:[%s0 + $0x80] sm:$0xff]
    %v45 = vld [vmem:[%s0 + $0x88] sm:$0xff]
    %v46 = vld [vmem:[%s0 + $0x90] sm:$0xff]
    %v47 = vld [vmem:[%s0 + $0x98] sm:$0xff]
    %v48 = vld [vmem:[%s0 + $0xa0] sm:$0xff]
    %v49 = vld [vmem:[%s0 + $0xa8] sm:$0xff]
    %v50 = vld [vmem:[%s0 + $0xb0] sm:$0xff]
    %v51 = vld [vmem:[%s0 + $0xb8] sm:$0xff]
    %v52 = vld [vmem:[%s0 + $0xc0] sm:$0xff]
    %v53 = vld [vmem:[%s0 + $0xc8] sm:$0xff]
    %v54 = vld [vmem:[%s0 + $0xd0] sm:$0xff]
    %v55 = vld [vmem:[%s0 + $0xd8] sm:$0xff]
    %v56 = vld [vmem:[%s0 + $0xe0] sm:$0xff]
    %v57 = vld [vmem:[%s0 + $0xe8] sm:$0xff]
    %v58 = vld [vmem:[%s0 + $0xf0] sm:$0xff]
    %v59 = vld [vmem:[%s0 + $0xf8] sm:$0xff]
    %v60 = vld [vmem:[%s1] sm:$0xff]
    %v61 = vld [vmem:[%s1 + $0x8] sm:$0xff]
    %v62 = vld [vmem:[%s1 + $0x10] sm:$0xff]
    %v63 = vld [vmem:[%s1 + $0x18] sm:$0xff]
    %v64 = vld [vmem:[%s1 + $0x20] sm:$0xff]
    %v65 = vld [vmem:[%s1 + $0x28] sm:$0xff]
    %v66 = vld [vmem:[%s1 + $0x30] sm:$0xff]
    %v67 = vld [vmem:[%s1 + $0x38] sm:$0xff]
    %v68 = vld [vmem:[%s1 + $0x40] sm:$0xff]
    %v69 = vld [vmem:[%s1 + $0x48] sm:$0xff]
    %v70 = vld [vmem:[%s1 + $0x50] sm:$0xff]
    %v71 = vld [vmem:[%s1 + $0x58] sm:$0xff]
    %v72 = vld [vmem:[%s1 + $0x60] sm:$0xff]
    %v73 = vld [vmem:[%s1 + $0x68] sm:$0xff]
    %v74 = vld [vmem:[%s1 + $0x70] sm:$0xff]
    %v75 = vld [vmem:[%s1 + $0x78] sm:$0xff]
    %v76 = vld [vmem:[%s1 + $0x80] sm:$0xff]
    %v77 = vld [vmem:[%s1 + $0x88] sm:$0xff]
    %v78 = vld [vmem:[%s1 + $0x90] sm:$0xff]
    %v79 = vld [vmem:[%s1 + $0x98] sm:$0xff]
    %v80 = vld [vmem:[%s1 + $0xa0] sm:$0xff]
    %v81 = vld [vmem:[%s1 + $0xa8] sm:$0xff]
    %v82 = vld [vmem:[%s1 + $0xb0] sm:$0xff]
    %v83 = vld [vmem:[%s1 + $0xb8] sm:$0xff]
    %v84 = vld [vmem:[%s1 + $0xc0] sm:$0xff]
    %v85 = vld [vmem:[%s1 + $0xc8] sm:$0xff]
    %v86 = vld [vmem:[%s1 + $0xd0] sm:$0xff]
    %v87 = vld [vmem:[%s1 + $0xd8] sm:$0xff]
    %v88 = vld [vmem:[%s1 + $0xe0] sm:$0xff]
    %v89 = vld [vmem:[%s1 + $0xe8] sm:$0xff]
    %v90 = vld [vmem:[%s1 + $0xf0] sm:$0xff]
    %v91 = vld [vmem:[%s1 + $0xf8] sm:$0xff]
    %v92 = vld [vmem:[%s1 + $0x100] sm:$0xff]
    %v93 = vld [vmem:[%s1 + $0x108] sm:$0xff]
    %v94 = vld [vmem:[%s1 + $0x110] sm:$0xff]
    %v95 = vld [vmem:[%s1 + $0x118] sm:$0xff]
    %v96 = vld [vmem:[%s1 + $0x120] sm:$0xff]
    %v97 = vld [vmem:[%s1 + $0x128] sm:$0xff]
    %v98 = vld [vmem:[%s1 + $0x130] sm:$0xff]
    %v99 = vld [vmem:[%s1 + $0x138] sm:$0xff]
    %v100 = vld [vmem:[%s1 + $0x140] sm:$0xff]
    %v101 = vld [vmem:[%s1 + $0x148] sm:$0xff]
    %v102 = vld [vmem:[%s1 + $0x150] sm:$0xff]
    %v103 = vld [vmem:[%s1 + $0x158] sm:$0xff]
    %v104 = vld [vmem:[%s1 + $0x160] sm:$0xff]
    %v105 = vld [vmem:[%s1 + $0x168] sm:$0xff]
    %v106 = vld [vmem:[%s1 + $0x170] sm:$0xff]
    %v107 = vld [vmem:[%s1 + $0x178] sm:$0xff]
    %vm108 = vcmask 523264
    %v110 = vsel %vm108, %v29, 0
    %v113 = vsel %vm108, %v31, 0
    %v116 = vsel %vm108, %v33, 0
    %v119 = vsel %vm108, %v35, 0
    %v122 = vsel %vm108, %v37, 0
    %v125 = vsel %vm108, %v39, 0
    %v128 = vsel %vm108, %v41, 0
    %v131 = vsel %vm108, %v43, 0
    %v134 = vsel %vm108, %v45, 0
    %v137 = vsel %vm108, %v47, 0
    %v140 = vsel %vm108, %v49, 0
    %v143 = vsel %vm108, %v51, 0
    %v146 = vsel %vm108, %v53, 0
    %v149 = vsel %vm108, %v55, 0
    %v152 = vsel %vm108, %v57, 0
    %v155 = vsel %vm108, %v59, 0
    %157 = vmatprep.subr.mxu0 %v61
    %158 = vmatpush1.msra.mxu0 %v60
    %159 = vmatprep.subr.mxu0 %v63
    %160 = vmatpush1.msra.mxu0 %v62
    %161 = vmatprep.subr.mxu0 %v65
    %162 = vmatpush1.msra.mxu0 %v64
    %163 = vmatprep.subr.mxu0 %v67
    %164 = vmatpush1.msra.mxu0 %v66
    %165 = vmatprep.subr.mxu0 %v69
    %166 = vmatpush1.msra.mxu0 %v68
    %167 = vmatprep.subr.mxu0 %v71
    %168 = vmatpush1.msra.mxu0 %v70
    %169 = vmatprep.subr.mxu0 %v73
    %170 = vmatpush1.msra.mxu0 %v72
    %171 = vmatprep.subr.mxu0 %v75
    %172 = vmatpush1.msra.mxu0 %v74
    %173 = vmatprep.subr.mxu0 %v77
    %174 = vmatpush1.msra.mxu0 %v76
    %175 = vmatprep.subr.mxu0 %v79
    %176 = vmatpush1.msra.mxu0 %v78
    %177 = vmatprep.subr.mxu0 %v81
    %178 = vmatpush1.msra.mxu0 %v80
    %179 = vmatprep.subr.mxu0 %v83
    %180 = vmatpush1.msra.mxu0 %v82
    %181 = vmatprep.subr.mxu0 %v85
    %182 = vmatpush1.msra.mxu0 %v84
    %183 = vmatprep.subr.mxu0 %v87
    %184 = vmatpush1.msra.mxu0 %v86
    %185 = vmatprep.subr.mxu0 %v89
    %186 = vmatpush1.msra.mxu0 %v88
    %187 = vmatprep.subr.mxu0 %v91
    %188 = vmatpush1.msra.mxu0 %v90
    %189 = vmatprep.subr.mxu0 %v93
    %190 = vmatpush1.msra.mxu0 %v92
    %191 = vmatprep.subr.mxu0 %v95
    %192 = vmatpush1.msra.mxu0 %v94
    %193 = vmatprep.subr.mxu0 %v97
    %194 = vmatpush1.msra.mxu0 %v96
    %195 = vmatprep.subr.mxu0 %v99
    %196 = vmatpush1.msra.mxu0 %v98
    %197 = vmatprep.subr.mxu0 %v101
    %198 = vmatpush1.msra.mxu0 %v100
    %199 = vmatprep.subr.mxu0 %v103
    %200 = vmatpush1.msra.mxu0 %v102
    %201 = vmatprep.subr.mxu0 %v105
    %202 = vmatpush1.msra.mxu0 %v104
    %203 = vmatprep.subr.mxu0 %v107
    %204 = vmatpush1.msra.mxu0 %v106
    %205 = vmatprep.subr.mxu0 0.0
    %206 = vmatpush1.msra.mxu0 0.0
    %207 = vmatprep.subr.mxu0 0.0
    %208 = vmatpush1.msra.mxu0 0.0
    %209 = vmatprep.subr.mxu0 0.0
    %210 = vmatpush1.msra.mxu0 0.0
    %211 = vmatprep.subr.mxu0 0.0
    %212 = vmatpush1.msra.mxu0 0.0
    %213 = vmatprep.subr.mxu0 0.0
    %214 = vmatpush1.msra.mxu0 0.0
    %215 = vmatprep.subr.mxu0 0.0
    %216 = vmatpush1.msra.mxu0 0.0
    %217 = vmatprep.subr.mxu0 0.0
    %218 = vmatpush1.msra.mxu0 0.0
    %219 = vmatprep.subr.mxu0 0.0
    %220 = vmatpush1.msra.mxu0 0.0
    %221 = vmatprep.mubr.f32.mxu0 %v110
    %222 = vmatmul.mubr.f32.gmra.mrb[0].mxu0 %v28
    %v223 = vpop.f32.mrb[0].mxu0
    %v224 = vadd.f32 0.0, %v223
    %v225 = vpop.f32.mrb[0].mxu0
    %v226 = vadd.f32 0.0, %v225
    %227 = vmatprep.mubr.f32.mxu0 %v113
    %228 = vmatmul.mubr.f32.gmra.mrb[0].mxu0 %v30
    %v229 = vpop.f32.mrb[0].mxu0
    %v230 = vadd.f32 0.0, %v229
    %v231 = vpop.f32.mrb[0].mxu0
    %v232 = vadd.f32 0.0, %v231
    %233 = vmatprep.mubr.f32.mxu0 %v116
    %234 = vmatmul.mubr.f32.gmra.mrb[0].mxu0 %v32
    %v235 = vpop.f32.mrb[0].mxu0
    %v236 = vadd.f32 0.0, %v235
    %v237 = vpop.f32.mrb[0].mxu0
    %v238 = vadd.f32 0.0, %v237
    %239 = vmatprep.mubr.f32.mxu0 %v119
    %240 = vmatmul.mubr.f32.gmra.mrb[0].mxu0 %v34
    %v241 = vpop.f32.mrb[0].mxu0
    %v242 = vadd.f32 0.0, %v241
    %v243 = vpop.f32.mrb[0].mxu0
    %v244 = vadd.f32 0.0, %v243
    %245 = vmatprep.mubr.f32.mxu0 %v122
    %246 = vmatmul.mubr.f32.gmra.mrb[0].mxu0 %v36
    %v247 = vpop.f32.mrb[0].mxu0
    %v248 = vadd.f32 0.0, %v247
    %v249 = vpop.f32.mrb[0].mxu0
    %v250 = vadd.f32 0.0, %v249
    %251 = vmatprep.mubr.f32.mxu0 %v125
    %252 = vmatmul.mubr.f32.gmra.mrb[0].mxu0 %v38
    %v253 = vpop.f32.mrb[0].mxu0
    %v254 = vadd.f32 0.0, %v253
    %v255 = vpop.f32.mrb[0].mxu0
    %v256 = vadd.f32 0.0, %v255
    %257 = vmatprep.mubr.f32.mxu0 %v128
    %258 = vmatmul.mubr.f32.gmra.mrb[0].mxu0 %v40
    %v259 = vpop.f32.mrb[0].mxu0
    %v260 = vadd.f32 0.0, %v259
    %v261 = vpop.f32.mrb[0].mxu0
    %v262 = vadd.f32 0.0, %v261
    %263 = vmatprep.mubr.f32.mxu0 %v131
    %264 = vmatmul.mubr.f32.gmra.mrb[0].mxu0 %v42
    %v265 = vpop.f32.mrb[0].mxu0
    %v266 = vadd.f32 0.0, %v265
    %v267 = vpop.f32.mrb[0].mxu0
    %v268 = vadd.f32 0.0, %v267
    %269 = vmatprep.mubr.f32.mxu0 %v134
    %270 = vmatmul.mubr.f32.gmra.mrb[0].mxu0 %v44
    %v271 = vpop.f32.mrb[0].mxu0
    %v272 = vadd.f32 0.0, %v271
    %v273 = vpop.f32.mrb[0].mxu0
    %v274 = vadd.f32 0.0, %v273
    %275 = vmatprep.mubr.f32.mxu0 %v137
    %276 = vmatmul.mubr.f32.gmra.mrb[0].mxu0 %v46
    %v277 = vpop.f32.mrb[0].mxu0
    %v278 = vadd.f32 0.0, %v277
    %v279 = vpop.f32.mrb[0].mxu0
    %v280 = vadd.f32 0.0, %v279
    %281 = vmatprep.mubr.f32.mxu0 %v140
    %282 = vmatmul.mubr.f32.gmra.mrb[0].mxu0 %v48
    %v283 = vpop.f32.mrb[0].mxu0
    %v284 = vadd.f32 0.0, %v283
    %v285 = vpop.f32.mrb[0].mxu0
    %v286 = vadd.f32 0.0, %v285
    %287 = vmatprep.mubr.f32.mxu0 %v143
    %288 = vmatmul.mubr.f32.gmra.mrb[0].mxu0 %v50
    %v289 = vpop.f32.mrb[0].mxu0
    %v290 = vadd.f32 0.0, %v289
    %v291 = vpop.f32.mrb[0].mxu0
    %v292 = vadd.f32 0.0, %v291
    %293 = vmatprep.mubr.f32.mxu0 %v146
    %294 = vmatmul.mubr.f32.gmra.mrb[0].mxu0 %v52
    %v295 = vpop.f32.mrb[0].mxu0
    %v296 = vadd.f32 0.0, %v295
    %v297 = vpop.f32.mrb[0].mxu0
    %v298 = vadd.f32 0.0, %v297
    %299 = vmatprep.mubr.f32.mxu0 %v149
    %300 = vmatmul.mubr.f32.gmra.mrb[0].mxu0 %v54
    %v301 = vpop.f32.mrb[0].mxu0
    %v302 = vadd.f32 0.0, %v301
    %v303 = vpop.f32.mrb[0].mxu0
    %v304 = vadd.f32 0.0, %v303
    %305 = vmatprep.mubr.f32.mxu0 %v152
    %306 = vmatmul.mubr.f32.gmra.mrb[0].mxu0 %v56
    %v307 = vpop.f32.mrb[0].mxu0
    %v308 = vadd.f32 0.0, %v307
    %v309 = vpop.f32.mrb[0].mxu0
    %v310 = vadd.f32 0.0, %v309
    %311 = vmatprep.mubr.f32.mxu0 %v155
    %312 = vmatmul.mubr.f32.gmra.mrb[0].mxu0 %v58
    %v313 = vpop.f32.mrb[0].mxu0
    %v314 = vadd.f32 0.0, %v313
    %v315 = vpop.f32.mrb[0].mxu0
    %v316 = vadd.f32 0.0, %v315
    %317 = vdwg.mxu0
    %v318 = vld [vmem:[#allocation2 + $0x280] ss:$0 sm:$0xff]
    %v319 = vld [vmem:[#allocation2 + $0x288] ss:$0 sm:$0xff]
    %v320 = vld [vmem:[#allocation2 + $0x290] ss:$0 sm:$0xff]
    %v321 = vld [vmem:[#allocation2 + $0x298] ss:$0 sm:$0xff]
    %v322 = vld [vmem:[#allocation2 + $0x2a0] ss:$0 sm:$0xff]
    %v323 = vld [vmem:[#allocation2] sm:$0xff]
    %v324 = vld [vmem:[#allocation2 + $0x28] sm:$0xff]
    %v325 = vld [vmem:[#allocation2 + $0x50] sm:$0xff]
    %v326 = vld [vmem:[#allocation2 + $0x78] sm:$0xff]
    %v327 = vld [vmem:[#allocation2 + $0xa0] sm:$0xff]
    %v328 = vld [vmem:[#allocation2 + $0xc8] sm:$0xff]
    %v329 = vld [vmem:[#allocation2 + $0xf0] sm:$0xff]
    %v330 = vld [vmem:[#allocation2 + $0x118] sm:$0xff]
    %v331 = vld [vmem:[#allocation2 + $0x140] sm:$0xff]
    %v332 = vld [vmem:[#allocation2 + $0x168] sm:$0xff]
    %v333 = vld [vmem:[#allocation2 + $0x190] sm:$0xff]
    %v334 = vld [vmem:[#allocation2 + $0x1b8] sm:$0xff]
    %v335 = vld [vmem:[#allocation2 + $0x1e0] sm:$0xff]
    %v336 = vld [vmem:[#allocation2 + $0x208] sm:$0xff]
    %v337 = vld [vmem:[#allocation2 + $0x230] sm:$0xff]
    %v338 = vld [vmem:[#allocation2 + $0x258] sm:$0xff]
    %v339 = vld [vmem:[#allocation2 + $0x8] sm:$0xff]
    %v340 = vld [vmem:[#allocation2 + $0x30] sm:$0xff]
    %v341 = vld [vmem:[#allocation2 + $0x58] sm:$0xff]
    %v342 = vld [vmem:[#allocation2 + $0x80] sm:$0xff]
    %v343 = vld [vmem:[#allocation2 + $0xa8] sm:$0xff]
    %v344 = vld [vmem:[#allocation2 + $0xd0] sm:$0xff]
    %v345 = vld [vmem:[#allocation2 + $0xf8] sm:$0xff]
    %v346 = vld [vmem:[#allocation2 + $0x120] sm:$0xff]
    %v347 = vld [vmem:[#allocation2 + $0x10] sm:$0xff]
    %v348 = vld [vmem:[#allocation2 + $0x38] sm:$0xff]
    %v349 = vld [vmem:[#allocation2 + $0x60] sm:$0xff]
    %v350 = vld [vmem:[#allocation2 + $0x88] sm:$0xff]
    %v351 = vld [vmem:[#allocation2 + $0xb0] sm:$0xff]
    %v352 = vld [vmem:[#allocation2 + $0xd8] sm:$0xff]
    %v353 = vld [vmem:[#allocation2 + $0x100] sm:$0xff]
    %v354 = vld [vmem:[#allocation2 + $0x128] sm:$0xff]
    %v355 = vld [vmem:[#allocation2 + $0x18] sm:$0xff]
    %v356 = vld [vmem:[#allocation2 + $0x40] sm:$0xff]
    %v357 = vld [vmem:[#allocation2 + $0x68] sm:$0xff]
    %v358 = vld [vmem:[#allocation2 + $0x90] sm:$0xff]
    %v359 = vld [vmem:[#allocation2 + $0xb8] sm:$0xff]
    %v360 = vld [vmem:[#allocation2 + $0xe0] sm:$0xff]
    %v361 = vld [vmem:[#allocation2 + $0x108] sm:$0xff]
    %v362 = vld [vmem:[#allocation2 + $0x130] sm:$0xff]
    %v363 = vld [vmem:[#allocation2 + $0x20] sm:$0xff]
    %v364 = vld [vmem:[#allocation2 + $0x48] sm:$0xff]
    %v365 = vld [vmem:[#allocation2 + $0x70] sm:$0xff]
    %v366 = vld [vmem:[#allocation2 + $0x98] sm:$0xff]
    %v367 = vadd.f32 %v224, %v318
    %v368 = vadd.f32 %v230, %v318
    %v369 = vadd.f32 %v236, %v318
    %v370 = vadd.f32 %v242, %v318
    %v371 = vadd.f32 %v248, %v318
    %v372 = vadd.f32 %v254, %v318
    %v373 = vadd.f32 %v260, %v318
    %v374 = vadd.f32 %v266, %v318
    %v375 = vadd.f32 %v272, %v318
    %v376 = vadd.f32 %v278, %v318
    %v377 = vadd.f32 %v284, %v318
    %v378 = vadd.f32 %v290, %v318
    %v379 = vadd.f32 %v296, %v318
    %v380 = vadd.f32 %v302, %v318
    %v381 = vadd.f32 %v308, %v318
    %v382 = vadd.f32 %v314, %v318
    %vm383 = vcmp.gt.f32.partialorder %v367, 0.0
    %vm384 = vcmp.gt.f32.partialorder %v368, 0.0
    %vm385 = vcmp.gt.f32.partialorder %v369, 0.0
    %vm386 = vcmp.gt.f32.partialorder %v370, 0.0
    %vm387 = vcmp.gt.f32.partialorder %v371, 0.0
    %vm388 = vcmp.gt.f32.partialorder %v372, 0.0
    %vm389 = vcmp.gt.f32.partialorder %v373, 0.0
    %vm390 = vcmp.gt.f32.partialorder %v374, 0.0
    %vm391 = vcmp.gt.f32.partialorder %v375, 0.0
    %vm392 = vcmp.gt.f32.partialorder %v376, 0.0
    %vm393 = vcmp.gt.f32.partialorder %v377, 0.0
    %vm394 = vcmp.gt.f32.partialorder %v378, 0.0
    %vm395 = vcmp.gt.f32.partialorder %v379, 0.0
    %vm396 = vcmp.gt.f32.partialorder %v380, 0.0
    %vm397 = vcmp.gt.f32.partialorder %v381, 0.0
    %vm398 = vcmp.gt.f32.partialorder %v382, 0.0
    %v399 = vmin.f32 %v367, 0.0
    %v400 = vmin.f32 %v368, 0.0
    %v401 = vmin.f32 %v369, 0.0
    %v402 = vmin.f32 %v370, 0.0
    %v403 = vmin.f32 %v371, 0.0
    %v404 = vmin.f32 %v372, 0.0
    %v405 = vmin.f32 %v373, 0.0
    %v406 = vmin.f32 %v374, 0.0
    %v407 = vmin.f32 %v375, 0.0
    %v408 = vmin.f32 %v376, 0.0
    %v409 = vmin.f32 %v377, 0.0
    %v410 = vmin.f32 %v378, 0.0
    %v411 = vmin.f32 %v379, 0.0
    %v412 = vmin.f32 %v380, 0.0
    %v413 = vmin.f32 %v381, 0.0
    %v414 = vmin.f32 %v382, 0.0
    %v415 = vmul.f32 %v399, 1.442695
    %v416 = vpow.pop %v415
    %v417 = vmul.f32 %v400, 1.442695
    %v418 = vpow.pop %v417
    %v419 = vmul.f32 %v401, 1.442695
    %v420 = vpow.pop %v419
    %v421 = vmul.f32 %v402, 1.442695
    %v422 = vpow.pop %v421
    %v423 = vmul.f32 %v403, 1.442695
    %v424 = vpow.pop %v423
    %v425 = vmul.f32 %v404, 1.442695
    %v426 = vpow.pop %v425
    %v427 = vmul.f32 %v405, 1.442695
    %v428 = vpow.pop %v427
    %v429 = vmul.f32 %v406, 1.442695
    %v430 = vpow.pop %v429
    %v431 = vmul.f32 %v407, 1.442695
    %v432 = vpow.pop %v431
    %v433 = vmul.f32 %v408, 1.442695
    %v434 = vpow.pop %v433
    %v435 = vmul.f32 %v409, 1.442695
    %v436 = vpow.pop %v435
    %v437 = vmul.f32 %v410, 1.442695
    %v438 = vpow.pop %v437
    %v439 = vmul.f32 %v411, 1.442695
    %v440 = vpow.pop %v439
    %v441 = vmul.f32 %v412, 1.442695
    %v442 = vpow.pop %v441
    %v443 = vmul.f32 %v413, 1.442695
    %v444 = vpow.pop %v443
    %v445 = vmul.f32 %v414, 1.442695
    %v446 = vpow.pop %v445
    %v447 = vsub.f32 %v416, 1.0
    %v448 = vsub.f32 %v418, 1.0
    %v449 = vsub.f32 %v420, 1.0
    %v450 = vsub.f32 %v422, 1.0
    %v451 = vsub.f32 %v424, 1.0
    %v452 = vsub.f32 %v426, 1.0
    %v453 = vsub.f32 %v428, 1.0
    %v454 = vsub.f32 %v430, 1.0
    %v455 = vsub.f32 %v432, 1.0
    %v456 = vsub.f32 %v434, 1.0
    %v457 = vsub.f32 %v436, 1.0
    %v458 = vsub.f32 %v438, 1.0
    %v459 = vsub.f32 %v440, 1.0
    %v460 = vsub.f32 %v442, 1.0
    %v461 = vsub.f32 %v444, 1.0
    %v462 = vsub.f32 %v446, 1.0
    %v463 = vsel %vm383, %v367, %v447
    %v464 = vsel %vm384, %v368, %v448
    %v465 = vsel %vm385, %v369, %v449
    %v466 = vsel %vm386, %v370, %v450
    %v467 = vsel %vm387, %v371, %v451
    %v468 = vsel %vm388, %v372, %v452
    %v469 = vsel %vm389, %v373, %v453
    %v470 = vsel %vm390, %v374, %v454
    %v471 = vsel %vm391, %v375, %v455
    %v472 = vsel %vm392, %v376, %v456
    %v473 = vsel %vm393, %v377, %v457
    %v474 = vsel %vm394, %v378, %v458
    %v475 = vsel %vm395, %v379, %v459
    %v476 = vsel %vm396, %v380, %v460
    %v477 = vsel %vm397, %v381, %v461
    %v478 = vsel %vm398, %v382, %v462
    %479 = vmatprep.subr.mxu0 0.0
    %480 = vmatpush1.msra.mxu0 %v323
    %481 = vmatprep.subr.mxu0 0.0
    %482 = vmatpush1.msra.mxu0 %v324
    %483 = vmatprep.subr.mxu0 0.0
    %484 = vmatpush1.msra.mxu0 %v325
    %485 = vmatprep.subr.mxu0 0.0
    %486 = vmatpush1.msra.mxu0 %v326
    %487 = vmatprep.subr.mxu0 0.0
    %488 = vmatpush1.msra.mxu0 %v327
    %489 = vmatprep.subr.mxu0 0.0
    %490 = vmatpush1.msra.mxu0 %v328
    %491 = vmatprep.subr.mxu0 0.0
    %492 = vmatpush1.msra.mxu0 %v329
    %493 = vmatprep.subr.mxu0 0.0
    %494 = vmatpush1.msra.mxu0 %v330
    %495 = vmatprep.subr.mxu0 0.0
    %496 = vmatpush1.msra.mxu0 %v331
    %497 = vmatprep.subr.mxu0 0.0
    %498 = vmatpush1.msra.mxu0 %v332
    %499 = vmatprep.subr.mxu0 0.0
    %500 = vmatpush1.msra.mxu0 %v333
    %501 = vmatprep.subr.mxu0 0.0
    %502 = vmatpush1.msra.mxu0 %v334
    %503 = vmatprep.subr.mxu0 0.0
    %504 = vmatpush1.msra.mxu0 %v335
    %505 = vmatprep.subr.mxu0 0.0
    %506 = vmatpush1.msra.mxu0 %v336
    %507 = vmatprep.subr.mxu0 0.0
    %508 = vmatpush1.msra.mxu0 %v337
    %509 = vmatprep.subr.mxu0 0.0
    %510 = vmatpush1.msra.mxu0 %v338
    %511 = vmatprep.subr.mxu0 0.0
    %512 = vmatpush1.msra.mxu0 0.0
    %513 = vmatprep.subr.mxu0 0.0
    %514 = vmatpush1.msra.mxu0 0.0
    %515 = vmatprep.subr.mxu0 0.0
    %516 = vmatpush1.msra.mxu0 0.0
    %517 = vmatprep.subr.mxu0 0.0
    %518 = vmatpush1.msra.mxu0 0.0
    %519 = vmatprep.subr.mxu0 0.0
    %520 = vmatpush1.msra.mxu0 0.0
    %521 = vmatprep.subr.mxu0 0.0
    %522 = vmatpush1.msra.mxu0 0.0
    %523 = vmatprep.subr.mxu0 0.0
    %524 = vmatpush1.msra.mxu0 0.0
    %525 = vmatprep.subr.mxu0 0.0
    %526 = vmatpush1.msra.mxu0 0.0
    %527 = vmatprep.subr.mxu0 0.0
    %528 = vmatpush1.msra.mxu0 0.0
    %529 = vmatprep.subr.mxu0 0.0
    %530 = vmatpush1.msra.mxu0 0.0
    %531 = vmatprep.subr.mxu0 0.0
    %532 = vmatpush1.msra.mxu0 0.0
    %533 = vmatprep.subr.mxu0 0.0
    %534 = vmatpush1.msra.mxu0 0.0
    %535 = vmatprep.subr.mxu0 0.0
    %536 = vmatpush1.msra.mxu0 0.0
    %537 = vmatprep.subr.mxu0 0.0
    %538 = vmatpush1.msra.mxu0 0.0
    %539 = vmatprep.subr.mxu0 0.0
    %540 = vmatpush1.msra.mxu0 0.0
    %541 = vmatprep.subr.mxu0 0.0
    %542 = vmatpush1.msra.mxu0 0.0
    %543 = vmatprep.mubr.f32.mxu0 0.0
    %544 = vmatmul.mubr.f32.gmra.mrb[0].mxu0 %v463
    %v545 = vpop.f32.mrb[0].mxu0
    %v546 = vadd.f32 %v319, %v545
    %v547 = vpop.f32.mrb[0].mxu0
    %548 = vmatprep.mubr.f32.mxu0 0.0
    %549 = vmatmul.mubr.f32.gmra.mrb[0].mxu0 %v464
    %v550 = vpop.f32.mrb[0].mxu0
    %v551 = vadd.f32 %v319, %v550
    %v552 = vpop.f32.mrb[0].mxu0
    %553 = vmatprep.mubr.f32.mxu0 0.0
    %554 = vmatmul.mubr.f32.gmra.mrb[0].mxu0 %v465
    %v555 = vpop.f32.mrb[0].mxu0
    %v556 = vadd.f32 %v319, %v555
    %v557 = vpop.f32.mrb[0].mxu0
    %558 = vmatprep.mubr.f32.mxu0 0.0
    %559 = vmatmul.mubr.f32.gmra.mrb[0].mxu0 %v466
    %v560 = vpop.f32.mrb[0].mxu0
    %v561 = vadd.f32 %v319, %v560
    %v562 = vpop.f32.mrb[0].mxu0
    %563 = vmatprep.mubr.f32.mxu0 0.0
    %564 = vmatmul.mubr.f32.gmra.mrb[0].mxu0 %v467
    %v565 = vpop.f32.mrb[0].mxu0
    %v566 = vadd.f32 %v319, %v565
    %v567 = vpop.f32.mrb[0].mxu0
    %568 = vmatprep.mubr.f32.mxu0 0.0
    %569 = vmatmul.mubr.f32.gmra.mrb[0].mxu0 %v468
    %v570 = vpop.f32.mrb[0].mxu0
    %v571 = vadd.f32 %v319, %v570
    %v572 = vpop.f32.mrb[0].mxu0
    %573 = vmatprep.mubr.f32.mxu0 0.0
    %574 = vmatmul.mubr.f32.gmra.mrb[0].mxu0 %v469
    %v575 = vpop.f32.mrb[0].mxu0
    %v576 = vadd.f32 %v319, %v575
    %v577 = vpop.f32.mrb[0].mxu0
    %578 = vmatprep.mubr.f32.mxu0 0.0
    %579 = vmatmul.mubr.f32.gmra.mrb[0].mxu0 %v470
    %v580 = vpop.f32.mrb[0].mxu0
    %v581 = vadd.f32 %v319, %v580
    %v582 = vpop.f32.mrb[0].mxu0
    %583 = vmatprep.mubr.f32.mxu0 0.0
    %584 = vmatmul.mubr.f32.gmra.mrb[0].mxu0 %v471
    %v585 = vpop.f32.mrb[0].mxu0
    %v586 = vadd.f32 %v319, %v585
    %v587 = vpop.f32.mrb[0].mxu0
    %588 = vmatprep.mubr.f32.mxu0 0.0
    %589 = vmatmul.mubr.f32.gmra.mrb[0].mxu0 %v472
    %v590 = vpop.f32.mrb[0].mxu0
    %v591 = vadd.f32 %v319, %v590
    %v592 = vpop.f32.mrb[0].mxu0
    %593 = vmatprep.mubr.f32.mxu0 0.0
    %594 = vmatmul.mubr.f32.gmra.mrb[0].mxu0 %v473
    %v595 = vpop.f32.mrb[0].mxu0
    %v596 = vadd.f32 %v319, %v595
    %v597 = vpop.f32.mrb[0].mxu0
    %598 = vmatprep.mubr.f32.mxu0 0.0
    %599 = vmatmul.mubr.f32.gmra.mrb[0].mxu0 %v474
    %v600 = vpop.f32.mrb[0].mxu0
    %v601 = vadd.f32 %v319, %v600
    %v602 = vpop.f32.mrb[0].mxu0
    %603 = vmatprep.mubr.f32.mxu0 0.0
    %604 = vmatmul.mubr.f32.gmra.mrb[0].mxu0 %v475
    %v605 = vpop.f32.mrb[0].mxu0
    %v606 = vadd.f32 %v319, %v605
    %v607 = vpop.f32.mrb[0].mxu0
    %608 = vmatprep.mubr.f32.mxu0 0.0
    %609 = vmatmul.mubr.f32.gmra.mrb[0].mxu0 %v476
    %v610 = vpop.f32.mrb[0].mxu0
    %v611 = vadd.f32 %v319, %v610
    %v612 = vpop.f32.mrb[0].mxu0
    %613 = vmatprep.mubr.f32.mxu0 0.0
    %614 = vmatmul.mubr.f32.gmra.mrb[0].mxu0 %v477
    %v615 = vpop.f32.mrb[0].mxu0
    %v616 = vadd.f32 %v319, %v615
    %v617 = vpop.f32.mrb[0].mxu0
    %618 = vmatprep.mubr.f32.mxu0 0.0
    %619 = vmatmul.mubr.f32.gmra.mrb[0].mxu0 %v478
    %v620 = vpop.f32.mrb[0].mxu0
    %v621 = vadd.f32 %v319, %v620
    %v622 = vpop.f32.mrb[0].mxu0
    %623 = vdwg.mxu0
    %vm624 = vcmp.gt.f32.partialorder %v546, 0.0
    %vm625 = vcmp.gt.f32.partialorder %v551, 0.0
    %vm626 = vcmp.gt.f32.partialorder %v556, 0.0
    %vm627 = vcmp.gt.f32.partialorder %v561, 0.0
    %vm628 = vcmp.gt.f32.partialorder %v566, 0.0
    %vm629 = vcmp.gt.f32.partialorder %v571, 0.0
    %vm630 = vcmp.gt.f32.partialorder %v576, 0.0
    %vm631 = vcmp.gt.f32.partialorder %v581, 0.0
    %vm632 = vcmp.gt.f32.partialorder %v586, 0.0
    %vm633 = vcmp.gt.f32.partialorder %v591, 0.0
    %vm634 = vcmp.gt.f32.partialorder %v596, 0.0
    %vm635 = vcmp.gt.f32.partialorder %v601, 0.0
    %vm636 = vcmp.gt.f32.partialorder %v606, 0.0
    %vm637 = vcmp.gt.f32.partialorder %v611, 0.0
    %vm638 = vcmp.gt.f32.partialorder %v616, 0.0
    %vm639 = vcmp.gt.f32.partialorder %v621, 0.0
    %v640 = vmin.f32 %v546, 0.0
    %v641 = vmin.f32 %v551, 0.0
    %v642 = vmin.f32 %v556, 0.0
    %v643 = vmin.f32 %v561, 0.0
    %v644 = vmin.f32 %v566, 0.0
    %v645 = vmin.f32 %v571, 0.0
    %v646 = vmin.f32 %v576, 0.0
    %v647 = vmin.f32 %v581, 0.0
    %v648 = vmin.f32 %v586, 0.0
    %v649 = vmin.f32 %v591, 0.0
    %v650 = vmin.f32 %v596, 0.0
    %v651 = vmin.f32 %v601, 0.0
    %v652 = vmin.f32 %v606, 0.0
    %v653 = vmin.f32 %v611, 0.0
    %v654 = vmin.f32 %v616, 0.0
    %v655 = vmin.f32 %v621, 0.0
    %v656 = vmul.f32 %v640, 1.442695
    %v657 = vpow.pop %v656
    %v658 = vmul.f32 %v641, 1.442695
    %v659 = vpow.pop %v658
    %v660 = vmul.f32 %v642, 1.442695
    %v661 = vpow.pop %v660
    %v662 = vmul.f32 %v643, 1.442695
    %v663 = vpow.pop %v662
    %v664 = vmul.f32 %v644, 1.442695
    %v665 = vpow.pop %v664
    %v666 = vmul.f32 %v645, 1.442695
    %v667 = vpow.pop %v666
    %v668 = vmul.f32 %v646, 1.442695
    %v669 = vpow.pop %v668
    %v670 = vmul.f32 %v647, 1.442695
    %v671 = vpow.pop %v670
    %v672 = vmul.f32 %v648, 1.442695
    %v673 = vpow.pop %v672
    %v674 = vmul.f32 %v649, 1.442695
    %v675 = vpow.pop %v674
    %v676 = vmul.f32 %v650, 1.442695
    %v677 = vpow.pop %v676
    %v678 = vmul.f32 %v651, 1.442695
    %v679 = vpow.pop %v678
    %v680 = vmul.f32 %v652, 1.442695
    %v681 = vpow.pop %v680
    %v682 = vmul.f32 %v653, 1.442695
    %v683 = vpow.pop %v682
    %v684 = vmul.f32 %v654, 1.442695
    %v685 = vpow.pop %v684
    %v686 = vmul.f32 %v655, 1.442695
    %v687 = vpow.pop %v686
    %v688 = vsub.f32 %v657, 1.0
    %v689 = vsub.f32 %v659, 1.0
    %v690 = vsub.f32 %v661, 1.0
    %v691 = vsub.f32 %v663, 1.0
    %v692 = vsub.f32 %v665, 1.0
    %v693 = vsub.f32 %v667, 1.0
    %v694 = vsub.f32 %v669, 1.0
    %v695 = vsub.f32 %v671, 1.0
    %v696 = vsub.f32 %v673, 1.0
    %v697 = vsub.f32 %v675, 1.0
    %v698 = vsub.f32 %v677, 1.0
    %v699 = vsub.f32 %v679, 1.0
    %v700 = vsub.f32 %v681, 1.0
    %v701 = vsub.f32 %v683, 1.0
    %v702 = vsub.f32 %v685, 1.0
    %v703 = vsub.f32 %v687, 1.0
    %v704 = vsel %vm624, %v546, %v688
    %v705 = vsel %vm625, %v551, %v689
    %v706 = vsel %vm626, %v556, %v690
    %v707 = vsel %vm627, %v561, %v691
    %v708 = vsel %vm628, %v566, %v692
    %v709 = vsel %vm629, %v571, %v693
    %v710 = vsel %vm630, %v576, %v694
    %v711 = vsel %vm631, %v581, %v695
    %v712 = vsel %vm632, %v586, %v696
    %v713 = vsel %vm633, %v591, %v697
    %v714 = vsel %vm634, %v596, %v698
    %v715 = vsel %vm635, %v601, %v699
    %v716 = vsel %vm636, %v606, %v700
    %v717 = vsel %vm637, %v611, %v701
    %v718 = vsel %vm638, %v616, %v702
    %v719 = vsel %vm639, %v621, %v703
    %v721 = vsel %vm108, %v704, 0
    %v724 = vsel %vm108, %v705, 0
    %v727 = vsel %vm108, %v706, 0
    %v730 = vsel %vm108, %v707, 0
    %v733 = vsel %vm108, %v708, 0
    %v736 = vsel %vm108, %v709, 0
    %v739 = vsel %vm108, %v710, 0
    %v742 = vsel %vm108, %v711, 0
    %v745 = vsel %vm108, %v712, 0
    %v748 = vsel %vm108, %v713, 0
    %v751 = vsel %vm108, %v714, 0
    %v754 = vsel %vm108, %v715, 0
    %v757 = vsel %vm108, %v716, 0
    %v760 = vsel %vm108, %v717, 0
    %v763 = vsel %vm108, %v718, 0
    %v766 = vsel %vm108, %v719, 0
    %768 = vmatprep.subr.mxu0 0.0
    %769 = vmatpush1.msra.mxu0 %v339
    %770 = vmatprep.subr.mxu0 0.0
    %771 = vmatpush1.msra.mxu0 %v340
    %772 = vmatprep.subr.mxu0 0.0
    %773 = vmatpush1.msra.mxu0 %v341
    %774 = vmatprep.subr.mxu0 0.0
    %775 = vmatpush1.msra.mxu0 %v342
    %776 = vmatprep.subr.mxu0 0.0
    %777 = vmatpush1.msra.mxu0 %v343
    %778 = vmatprep.subr.mxu0 0.0
    %779 = vmatpush1.msra.mxu0 %v344
    %780 = vmatprep.subr.mxu0 0.0
    %781 = vmatpush1.msra.mxu0 %v345
    %782 = vmatprep.subr.mxu0 0.0
    %783 = vmatpush1.msra.mxu0 %v346
    %784 = vmatprep.subr.mxu0 0.0
    %785 = vmatpush1.msra.mxu0 0.0
    %786 = vmatprep.subr.mxu0 0.0
    %787 = vmatpush1.msra.mxu0 0.0
    %788 = vmatprep.subr.mxu0 0.0
    %789 = vmatpush1.msra.mxu0 0.0
    %790 = vmatprep.subr.mxu0 0.0
    %791 = vmatpush1.msra.mxu0 0.0
    %792 = vmatprep.subr.mxu0 0.0
    %793 = vmatpush1.msra.mxu0 0.0
    %794 = vmatprep.subr.mxu0 0.0
    %795 = vmatpush1.msra.mxu0 0.0
    %796 = vmatprep.subr.mxu0 0.0
    %797 = vmatpush1.msra.mxu0 0.0
    %798 = vmatprep.subr.mxu0 0.0
    %799 = vmatpush1.msra.mxu0 0.0
    %800 = vmatprep.subr.mxu0 0.0
    %801 = vmatpush1.msra.mxu0 0.0
    %802 = vmatprep.subr.mxu0 0.0
    %803 = vmatpush1.msra.mxu0 0.0
    %804 = vmatprep.subr.mxu0 0.0
    %805 = vmatpush1.msra.mxu0 0.0
    %806 = vmatprep.subr.mxu0 0.0
    %807 = vmatpush1.msra.mxu0 0.0
    %808 = vmatprep.subr.mxu0 0.0
    %809 = vmatpush1.msra.mxu0 0.0
    %810 = vmatprep.subr.mxu0 0.0
    %811 = vmatpush1.msra.mxu0 0.0
    %812 = vmatprep.subr.mxu0 0.0
    %813 = vmatpush1.msra.mxu0 0.0
    %814 = vmatprep.subr.mxu0 0.0
    %815 = vmatpush1.msra.mxu0 0.0
    %816 = vmatprep.subr.mxu0 0.0
    %817 = vmatpush1.msra.mxu0 0.0
    %818 = vmatprep.subr.mxu0 0.0
    %819 = vmatpush1.msra.mxu0 0.0
    %820 = vmatprep.subr.mxu0 0.0
    %821 = vmatpush1.msra.mxu0 0.0
    %822 = vmatprep.subr.mxu0 0.0
    %823 = vmatpush1.msra.mxu0 0.0
    %824 = vmatprep.subr.mxu0 0.0
    %825 = vmatpush1.msra.mxu0 0.0
    %826 = vmatprep.subr.mxu0 0.0
    %827 = vmatpush1.msra.mxu0 0.0
    %828 = vmatprep.subr.mxu0 0.0
    %829 = vmatpush1.msra.mxu0 0.0
    %830 = vmatprep.subr.mxu0 0.0
    %831 = vmatpush1.msra.mxu0 0.0
    %832 = vmatprep.mubr.f32.mxu0 0.0
    %833 = vmatmul.mubr.f32.gmra.mrb[0].mxu0 %v721
    %v834 = vpop.f32.mrb[0].mxu0
    %v835 = vadd.f32 %v226, %v834
    %v836 = vpop.f32.mrb[0].mxu0
    %837 = vmatprep.mubr.f32.mxu0 0.0
    %838 = vmatmul.mubr.f32.gmra.mrb[0].mxu0 %v724
    %v839 = vpop.f32.mrb[0].mxu0
    %v840 = vadd.f32 %v232, %v839
    %v841 = vpop.f32.mrb[0].mxu0
    %842 = vmatprep.mubr.f32.mxu0 0.0
    %843 = vmatmul.mubr.f32.gmra.mrb[0].mxu0 %v727
    %v844 = vpop.f32.mrb[0].mxu0
    %v845 = vadd.f32 %v238, %v844
    %v846 = vpop.f32.mrb[0].mxu0
    %847 = vmatprep.mubr.f32.mxu0 0.0
    %848 = vmatmul.mubr.f32.gmra.mrb[0].mxu0 %v730
    %v849 = vpop.f32.mrb[0].mxu0
    %v850 = vadd.f32 %v244, %v849
    %v851 = vpop.f32.mrb[0].mxu0
    %852 = vmatprep.mubr.f32.mxu0 0.0
    %853 = vmatmul.mubr.f32.gmra.mrb[0].mxu0 %v733
    %v854 = vpop.f32.mrb[0].mxu0
    %v855 = vadd.f32 %v250, %v854
    %v856 = vpop.f32.mrb[0].mxu0
    %857 = vmatprep.mubr.f32.mxu0 0.0
    %858 = vmatmul.mubr.f32.gmra.mrb[0].mxu0 %v736
    %v859 = vpop.f32.mrb[0].mxu0
    %v860 = vadd.f32 %v256, %v859
    %v861 = vpop.f32.mrb[0].mxu0
    %862 = vmatprep.mubr.f32.mxu0 0.0
    %863 = vmatmul.mubr.f32.gmra.mrb[0].mxu0 %v739
    %v864 = vpop.f32.mrb[0].mxu0
    %v865 = vadd.f32 %v262, %v864
    %v866 = vpop.f32.mrb[0].mxu0
    %867 = vmatprep.mubr.f32.mxu0 0.0
    %868 = vmatmul.mubr.f32.gmra.mrb[0].mxu0 %v742
    %v869 = vpop.f32.mrb[0].mxu0
    %v870 = vadd.f32 %v268, %v869
    %v871 = vpop.f32.mrb[0].mxu0
    %872 = vmatprep.mubr.f32.mxu0 0.0
    %873 = vmatmul.mubr.f32.gmra.mrb[0].mxu0 %v745
    %v874 = vpop.f32.mrb[0].mxu0
    %v875 = vadd.f32 %v274, %v874
    %v876 = vpop.f32.mrb[0].mxu0
    %877 = vmatprep.mubr.f32.mxu0 0.0
    %878 = vmatmul.mubr.f32.gmra.mrb[0].mxu0 %v748
    %v879 = vpop.f32.mrb[0].mxu0
    %v880 = vadd.f32 %v280, %v879
    %v881 = vpop.f32.mrb[0].mxu0
    %882 = vmatprep.mubr.f32.mxu0 0.0
    %883 = vmatmul.mubr.f32.gmra.mrb[0].mxu0 %v751
    %v884 = vpop.f32.mrb[0].mxu0
    %v885 = vadd.f32 %v286, %v884
    %v886 = vpop.f32.mrb[0].mxu0
    %887 = vmatprep.mubr.f32.mxu0 0.0
    %888 = vmatmul.mubr.f32.gmra.mrb[0].mxu0 %v754
    %v889 = vpop.f32.mrb[0].mxu0
    %v890 = vadd.f32 %v292, %v889
    %v891 = vpop.f32.mrb[0].mxu0
    %892 = vmatprep.mubr.f32.mxu0 0.0
    %893 = vmatmul.mubr.f32.gmra.mrb[0].mxu0 %v757
    %v894 = vpop.f32.mrb[0].mxu0
    %v895 = vadd.f32 %v298, %v894
    %v896 = vpop.f32.mrb[0].mxu0
    %897 = vmatprep.mubr.f32.mxu0 0.0
    %898 = vmatmul.mubr.f32.gmra.mrb[0].mxu0 %v760
    %v899 = vpop.f32.mrb[0].mxu0
    %v900 = vadd.f32 %v304, %v899
    %v901 = vpop.f32.mrb[0].mxu0
    %902 = vmatprep.mubr.f32.mxu0 0.0
    %903 = vmatmul.mubr.f32.gmra.mrb[0].mxu0 %v763
    %v904 = vpop.f32.mrb[0].mxu0
    %v905 = vadd.f32 %v310, %v904
    %v906 = vpop.f32.mrb[0].mxu0
    %907 = vmatprep.mubr.f32.mxu0 0.0
    %908 = vmatmul.mubr.f32.gmra.mrb[0].mxu0 %v766
    %v909 = vpop.f32.mrb[0].mxu0
    %v910 = vadd.f32 %v316, %v909
    %v911 = vpop.f32.mrb[0].mxu0
    %912 = vdwg.mxu0
    %v913 = vadd.f32 %v835, %v320
    %v914 = vadd.f32 %v840, %v320
    %v915 = vadd.f32 %v845, %v320
    %v916 = vadd.f32 %v850, %v320
    %v917 = vadd.f32 %v855, %v320
    %v918 = vadd.f32 %v860, %v320
    %v919 = vadd.f32 %v865, %v320
    %v920 = vadd.f32 %v870, %v320
    %v921 = vadd.f32 %v875, %v320
    %v922 = vadd.f32 %v880, %v320
    %v923 = vadd.f32 %v885, %v320
    %v924 = vadd.f32 %v890, %v320
    %v925 = vadd.f32 %v895, %v320
    %v926 = vadd.f32 %v900, %v320
    %v927 = vadd.f32 %v905, %v320
    %v928 = vadd.f32 %v910, %v320
    %vm929 = vcmp.gt.f32.partialorder %v913, 0.0
    %vm930 = vcmp.gt.f32.partialorder %v914, 0.0
    %vm931 = vcmp.gt.f32.partialorder %v915, 0.0
    %vm932 = vcmp.gt.f32.partialorder %v916, 0.0
    %vm933 = vcmp.gt.f32.partialorder %v917, 0.0
    %vm934 = vcmp.gt.f32.partialorder %v918, 0.0
    %vm935 = vcmp.gt.f32.partialorder %v919, 0.0
    %vm936 = vcmp.gt.f32.partialorder %v920, 0.0
    %vm937 = vcmp.gt.f32.partialorder %v921, 0.0
    %vm938 = vcmp.gt.f32.partialorder %v922, 0.0
    %vm939 = vcmp.gt.f32.partialorder %v923, 0.0
    %vm940 = vcmp.gt.f32.partialorder %v924, 0.0
    %vm941 = vcmp.gt.f32.partialorder %v925, 0.0
    %vm942 = vcmp.gt.f32.partialorder %v926, 0.0
    %vm943 = vcmp.gt.f32.partialorder %v927, 0.0
    %vm944 = vcmp.gt.f32.partialorder %v928, 0.0
    %v945 = vmin.f32 %v913, 0.0
    %v946 = vmin.f32 %v914, 0.0
    %v947 = vmin.f32 %v915, 0.0
    %v948 = vmin.f32 %v916, 0.0
    %v949 = vmin.f32 %v917, 0.0
    %v950 = vmin.f32 %v918, 0.0
    %v951 = vmin.f32 %v919, 0.0
    %v952 = vmin.f32 %v920, 0.0
    %v953 = vmin.f32 %v921, 0.0
    %v954 = vmin.f32 %v922, 0.0
    %v955 = vmin.f32 %v923, 0.0
    %v956 = vmin.f32 %v924, 0.0
    %v957 = vmin.f32 %v925, 0.0
    %v958 = vmin.f32 %v926, 0.0
    %v959 = vmin.f32 %v927, 0.0
    %v960 = vmin.f32 %v928, 0.0
    %v961 = vmul.f32 %v945, 1.442695
    %v962 = vpow.pop %v961
    %v963 = vmul.f32 %v946, 1.442695
    %v964 = vpow.pop %v963
    %v965 = vmul.f32 %v947, 1.442695
    %v966 = vpow.pop %v965
    %v967 = vmul.f32 %v948, 1.442695
    %v968 = vpow.pop %v967
    %v969 = vmul.f32 %v949, 1.442695
    %v970 = vpow.pop %v969
    %v971 = vmul.f32 %v950, 1.442695
    %v972 = vpow.pop %v971
    %v973 = vmul.f32 %v951, 1.442695
    %v974 = vpow.pop %v973
    %v975 = vmul.f32 %v952, 1.442695
    %v976 = vpow.pop %v975
    %v977 = vmul.f32 %v953, 1.442695
    %v978 = vpow.pop %v977
    %v979 = vmul.f32 %v954, 1.442695
    %v980 = vpow.pop %v979
    %v981 = vmul.f32 %v955, 1.442695
    %v982 = vpow.pop %v981
    %v983 = vmul.f32 %v956, 1.442695
    %v984 = vpow.pop %v983
    %v985 = vmul.f32 %v957, 1.442695
    %v986 = vpow.pop %v985
    %v987 = vmul.f32 %v958, 1.442695
    %v988 = vpow.pop %v987
    %v989 = vmul.f32 %v959, 1.442695
    %v990 = vpow.pop %v989
    %v991 = vmul.f32 %v960, 1.442695
    %v992 = vpow.pop %v991
    %v993 = vsub.f32 %v962, 1.0
    %v994 = vsub.f32 %v964, 1.0
    %v995 = vsub.f32 %v966, 1.0
    %v996 = vsub.f32 %v968, 1.0
    %v997 = vsub.f32 %v970, 1.0
    %v998 = vsub.f32 %v972, 1.0
    %v999 = vsub.f32 %v974, 1.0
    %v1000 = vsub.f32 %v976, 1.0
    %v1001 = vsub.f32 %v978, 1.0
    %v1002 = vsub.f32 %v980, 1.0
    %v1003 = vsub.f32 %v982, 1.0
    %v1004 = vsub.f32 %v984, 1.0
    %v1005 = vsub.f32 %v986, 1.0
    %v1006 = vsub.f32 %v988, 1.0
    %v1007 = vsub.f32 %v990, 1.0
    %v1008 = vsub.f32 %v992, 1.0
    %v1009 = vsel %vm929, %v913, %v993
    %v1010 = vsel %vm930, %v914, %v994
    %v1011 = vsel %vm931, %v915, %v995
    %v1012 = vsel %vm932, %v916, %v996
    %v1013 = vsel %vm933, %v917, %v997
    %v1014 = vsel %vm934, %v918, %v998
    %v1015 = vsel %vm935, %v919, %v999
    %v1016 = vsel %vm936, %v920, %v1000
    %v1017 = vsel %vm937, %v921, %v1001
    %v1018 = vsel %vm938, %v922, %v1002
    %v1019 = vsel %vm939, %v923, %v1003
    %v1020 = vsel %vm940, %v924, %v1004
    %v1021 = vsel %vm941, %v925, %v1005
    %v1022 = vsel %vm942, %v926, %v1006
    %v1023 = vsel %vm943, %v927, %v1007
    %v1024 = vsel %vm944, %v928, %v1008
    %v1026 = vsel %vm108, %v1009, 0
    %v1029 = vsel %vm108, %v1010, 0
    %v1032 = vsel %vm108, %v1011, 0
    %v1035 = vsel %vm108, %v1012, 0
    %v1038 = vsel %vm108, %v1013, 0
    %v1041 = vsel %vm108, %v1014, 0
    %v1044 = vsel %vm108, %v1015, 0
    %v1047 = vsel %vm108, %v1016, 0
    %v1050 = vsel %vm108, %v1017, 0
    %v1053 = vsel %vm108, %v1018, 0
    %v1056 = vsel %vm108, %v1019, 0
    %v1059 = vsel %vm108, %v1020, 0
    %v1062 = vsel %vm108, %v1021, 0
    %v1065 = vsel %vm108, %v1022, 0
    %v1068 = vsel %vm108, %v1023, 0
    %v1071 = vsel %vm108, %v1024, 0
    %1073 = vmatprep.subr.mxu0 0.0
    %1074 = vmatpush1.msra.mxu0 %v347
    %1075 = vmatprep.subr.mxu0 0.0
    %1076 = vmatpush1.msra.mxu0 %v348
    %1077 = vmatprep.subr.mxu0 0.0
    %1078 = vmatpush1.msra.mxu0 %v349
    %1079 = vmatprep.subr.mxu0 0.0
    %1080 = vmatpush1.msra.mxu0 %v350
    %1081 = vmatprep.subr.mxu0 0.0
    %1082 = vmatpush1.msra.mxu0 %v351
    %1083 = vmatprep.subr.mxu0 0.0
    %1084 = vmatpush1.msra.mxu0 %v352
    %1085 = vmatprep.subr.mxu0 0.0
    %1086 = vmatpush1.msra.mxu0 %v353
    %1087 = vmatprep.subr.mxu0 0.0
    %1088 = vmatpush1.msra.mxu0 %v354
    %1089 = vmatprep.subr.mxu0 0.0
    %1090 = vmatpush1.msra.mxu0 0.0
    %1091 = vmatprep.subr.mxu0 0.0
    %1092 = vmatpush1.msra.mxu0 0.0
    %1093 = vmatprep.subr.mxu0 0.0
    %1094 = vmatpush1.msra.mxu0 0.0
    %1095 = vmatprep.subr.mxu0 0.0
    %1096 = vmatpush1.msra.mxu0 0.0
    %1097 = vmatprep.subr.mxu0 0.0
    %1098 = vmatpush1.msra.mxu0 0.0
    %1099 = vmatprep.subr.mxu0 0.0
    %1100 = vmatpush1.msra.mxu0 0.0
    %1101 = vmatprep.subr.mxu0 0.0
    %1102 = vmatpush1.msra.mxu0 0.0
    %1103 = vmatprep.subr.mxu0 0.0
    %1104 = vmatpush1.msra.mxu0 0.0
    %1105 = vmatprep.subr.mxu0 0.0
    %1106 = vmatpush1.msra.mxu0 0.0
    %1107 = vmatprep.subr.mxu0 0.0
    %1108 = vmatpush1.msra.mxu0 0.0
    %1109 = vmatprep.subr.mxu0 0.0
    %1110 = vmatpush1.msra.mxu0 0.0
    %1111 = vmatprep.subr.mxu0 0.0
    %1112 = vmatpush1.msra.mxu0 0.0
    %1113 = vmatprep.subr.mxu0 0.0
    %1114 = vmatpush1.msra.mxu0 0.0
    %1115 = vmatprep.subr.mxu0 0.0
    %1116 = vmatpush1.msra.mxu0 0.0
    %1117 = vmatprep.subr.mxu0 0.0
    %1118 = vmatpush1.msra.mxu0 0.0
    %1119 = vmatprep.subr.mxu0 0.0
    %1120 = vmatpush1.msra.mxu0 0.0
    %1121 = vmatprep.subr.mxu0 0.0
    %1122 = vmatpush1.msra.mxu0 0.0
    %1123 = vmatprep.subr.mxu0 0.0
    %1124 = vmatpush1.msra.mxu0 0.0
    %1125 = vmatprep.subr.mxu0 0.0
    %1126 = vmatpush1.msra.mxu0 0.0
    %1127 = vmatprep.subr.mxu0 0.0
    %1128 = vmatpush1.msra.mxu0 0.0
    %1129 = vmatprep.subr.mxu0 0.0
    %1130 = vmatpush1.msra.mxu0 0.0
    %1131 = vmatprep.subr.mxu0 0.0
    %1132 = vmatpush1.msra.mxu0 0.0
    %1133 = vmatprep.subr.mxu0 0.0
    %1134 = vmatpush1.msra.mxu0 0.0
    %1135 = vmatprep.subr.mxu0 0.0
    %1136 = vmatpush1.msra.mxu0 0.0
    %1137 = vmatprep.mubr.f32.mxu0 0.0
    %1138 = vmatmul.mubr.f32.gmra.mrb[0].mxu0 %v1026
    %v1139 = vpop.f32.mrb[0].mxu0
    %v1140 = vadd.f32 %v321, %v1139
    %v1141 = vpop.f32.mrb[0].mxu0
    %1142 = vmatprep.mubr.f32.mxu0 0.0
    %1143 = vmatmul.mubr.f32.gmra.mrb[0].mxu0 %v1029
    %v1144 = vpop.f32.mrb[0].mxu0
    %v1145 = vadd.f32 %v321, %v1144
    %v1146 = vpop.f32.mrb[0].mxu0
    %1147 = vmatprep.mubr.f32.mxu0 0.0
    %1148 = vmatmul.mubr.f32.gmra.mrb[0].mxu0 %v1032
    %v1149 = vpop.f32.mrb[0].mxu0
    %v1150 = vadd.f32 %v321, %v1149
    %v1151 = vpop.f32.mrb[0].mxu0
    %1152 = vmatprep.mubr.f32.mxu0 0.0
    %1153 = vmatmul.mubr.f32.gmra.mrb[0].mxu0 %v1035
    %v1154 = vpop.f32.mrb[0].mxu0
    %v1155 = vadd.f32 %v321, %v1154
    %v1156 = vpop.f32.mrb[0].mxu0
    %1157 = vmatprep.mubr.f32.mxu0 0.0
    %1158 = vmatmul.mubr.f32.gmra.mrb[0].mxu0 %v1038
    %v1159 = vpop.f32.mrb[0].mxu0
    %v1160 = vadd.f32 %v321, %v1159
    %v1161 = vpop.f32.mrb[0].mxu0
    %1162 = vmatprep.mubr.f32.mxu0 0.0
    %1163 = vmatmul.mubr.f32.gmra.mrb[0].mxu0 %v1041
    %v1164 = vpop.f32.mrb[0].mxu0
    %v1165 = vadd.f32 %v321, %v1164
    %v1166 = vpop.f32.mrb[0].mxu0
    %1167 = vmatprep.mubr.f32.mxu0 0.0
    %1168 = vmatmul.mubr.f32.gmra.mrb[0].mxu0 %v1044
    %v1169 = vpop.f32.mrb[0].mxu0
    %v1170 = vadd.f32 %v321, %v1169
    %v1171 = vpop.f32.mrb[0].mxu0
    %1172 = vmatprep.mubr.f32.mxu0 0.0
    %1173 = vmatmul.mubr.f32.gmra.mrb[0].mxu0 %v1047
    %v1174 = vpop.f32.mrb[0].mxu0
    %v1175 = vadd.f32 %v321, %v1174
    %v1176 = vpop.f32.mrb[0].mxu0
    %1177 = vmatprep.mubr.f32.mxu0 0.0
    %1178 = vmatmul.mubr.f32.gmra.mrb[0].mxu0 %v1050
    %v1179 = vpop.f32.mrb[0].mxu0
    %v1180 = vadd.f32 %v321, %v1179
    %v1181 = vpop.f32.mrb[0].mxu0
    %1182 = vmatprep.mubr.f32.mxu0 0.0
    %1183 = vmatmul.mubr.f32.gmra.mrb[0].mxu0 %v1053
    %v1184 = vpop.f32.mrb[0].mxu0
    %v1185 = vadd.f32 %v321, %v1184
    %v1186 = vpop.f32.mrb[0].mxu0
    %1187 = vmatprep.mubr.f32.mxu0 0.0
    %1188 = vmatmul.mubr.f32.gmra.mrb[0].mxu0 %v1056
    %v1189 = vpop.f32.mrb[0].mxu0
    %v1190 = vadd.f32 %v321, %v1189
    %v1191 = vpop.f32.mrb[0].mxu0
    %1192 = vmatprep.mubr.f32.mxu0 0.0
    %1193 = vmatmul.mubr.f32.gmra.mrb[0].mxu0 %v1059
    %v1194 = vpop.f32.mrb[0].mxu0
    %v1195 = vadd.f32 %v321, %v1194
    %v1196 = vpop.f32.mrb[0].mxu0
    %1197 = vmatprep.mubr.f32.mxu0 0.0
    %1198 = vmatmul.mubr.f32.gmra.mrb[0].mxu0 %v1062
    %v1199 = vpop.f32.mrb[0].mxu0
    %v1200 = vadd.f32 %v321, %v1199
    %v1201 = vpop.f32.mrb[0].mxu0
    %1202 = vmatprep.mubr.f32.mxu0 0.0
    %1203 = vmatmul.mubr.f32.gmra.mrb[0].mxu0 %v1065
    %v1204 = vpop.f32.mrb[0].mxu0
    %v1205 = vadd.f32 %v321, %v1204
    %v1206 = vpop.f32.mrb[0].mxu0
    %1207 = vmatprep.mubr.f32.mxu0 0.0
    %1208 = vmatmul.mubr.f32.gmra.mrb[0].mxu0 %v1068
    %v1209 = vpop.f32.mrb[0].mxu0
    %v1210 = vadd.f32 %v321, %v1209
    %v1211 = vpop.f32.mrb[0].mxu0
    %1212 = vmatprep.mubr.f32.mxu0 0.0
    %1213 = vmatmul.mubr.f32.gmra.mrb[0].mxu0 %v1071
    %v1214 = vpop.f32.mrb[0].mxu0
    %v1215 = vadd.f32 %v321, %v1214
    %v1216 = vpop.f32.mrb[0].mxu0
    %1217 = vdwg.mxu0
    %vm1218 = vcmp.gt.f32.partialorder %v1140, 0.0
    %vm1219 = vcmp.gt.f32.partialorder %v1145, 0.0
    %vm1220 = vcmp.gt.f32.partialorder %v1150, 0.0
    %vm1221 = vcmp.gt.f32.partialorder %v1155, 0.0
    %vm1222 = vcmp.gt.f32.partialorder %v1160, 0.0
    %vm1223 = vcmp.gt.f32.partialorder %v1165, 0.0
    %vm1224 = vcmp.gt.f32.partialorder %v1170, 0.0
    %vm1225 = vcmp.gt.f32.partialorder %v1175, 0.0
    %vm1226 = vcmp.gt.f32.partialorder %v1180, 0.0
    %vm1227 = vcmp.gt.f32.partialorder %v1185, 0.0
    %vm1228 = vcmp.gt.f32.partialorder %v1190, 0.0
    %vm1229 = vcmp.gt.f32.partialorder %v1195, 0.0
    %vm1230 = vcmp.gt.f32.partialorder %v1200, 0.0
    %vm1231 = vcmp.gt.f32.partialorder %v1205, 0.0
    %vm1232 = vcmp.gt.f32.partialorder %v1210, 0.0
    %vm1233 = vcmp.gt.f32.partialorder %v1215, 0.0
    %v1234 = vmin.f32 %v1140, 0.0
    %v1235 = vmin.f32 %v1145, 0.0
    %v1236 = vmin.f32 %v1150, 0.0
    %v1237 = vmin.f32 %v1155, 0.0
    %v1238 = vmin.f32 %v1160, 0.0
    %v1239 = vmin.f32 %v1165, 0.0
    %v1240 = vmin.f32 %v1170, 0.0
    %v1241 = vmin.f32 %v1175, 0.0
    %v1242 = vmin.f32 %v1180, 0.0
    %v1243 = vmin.f32 %v1185, 0.0
    %v1244 = vmin.f32 %v1190, 0.0
    %v1245 = vmin.f32 %v1195, 0.0
    %v1246 = vmin.f32 %v1200, 0.0
    %v1247 = vmin.f32 %v1205, 0.0
    %v1248 = vmin.f32 %v1210, 0.0
    %v1249 = vmin.f32 %v1215, 0.0
    %v1250 = vmul.f32 %v1234, 1.442695
    %v1251 = vpow.pop %v1250
    %v1252 = vmul.f32 %v1235, 1.442695
    %v1253 = vpow.pop %v1252
    %v1254 = vmul.f32 %v1236, 1.442695
    %v1255 = vpow.pop %v1254
    %v1256 = vmul.f32 %v1237, 1.442695
    %v1257 = vpow.pop %v1256
    %v1258 = vmul.f32 %v1238, 1.442695
    %v1259 = vpow.pop %v1258
    %v1260 = vmul.f32 %v1239, 1.442695
    %v1261 = vpow.pop %v1260
    %v1262 = vmul.f32 %v1240, 1.442695
    %v1263 = vpow.pop %v1262
    %v1264 = vmul.f32 %v1241, 1.442695
    %v1265 = vpow.pop %v1264
    %v1266 = vmul.f32 %v1242, 1.442695
    %v1267 = vpow.pop %v1266
    %v1268 = vmul.f32 %v1243, 1.442695
    %v1269 = vpow.pop %v1268
    %v1270 = vmul.f32 %v1244, 1.442695
    %v1271 = vpow.pop %v1270
    %v1272 = vmul.f32 %v1245, 1.442695
    %v1273 = vpow.pop %v1272
    %v1274 = vmul.f32 %v1246, 1.442695
    %v1275 = vpow.pop %v1274
    %v1276 = vmul.f32 %v1247, 1.442695
    %v1277 = vpow.pop %v1276
    %v1278 = vmul.f32 %v1248, 1.442695
    %v1279 = vpow.pop %v1278
    %v1280 = vmul.f32 %v1249, 1.442695
    %v1281 = vpow.pop %v1280
    %v1282 = vsub.f32 %v1251, 1.0
    %v1283 = vsub.f32 %v1253, 1.0
    %v1284 = vsub.f32 %v1255, 1.0
    %v1285 = vsub.f32 %v1257, 1.0
    %v1286 = vsub.f32 %v1259, 1.0
    %v1287 = vsub.f32 %v1261, 1.0
    %v1288 = vsub.f32 %v1263, 1.0
    %v1289 = vsub.f32 %v1265, 1.0
    %v1290 = vsub.f32 %v1267, 1.0
    %v1291 = vsub.f32 %v1269, 1.0
    %v1292 = vsub.f32 %v1271, 1.0
    %v1293 = vsub.f32 %v1273, 1.0
    %v1294 = vsub.f32 %v1275, 1.0
    %v1295 = vsub.f32 %v1277, 1.0
    %v1296 = vsub.f32 %v1279, 1.0
    %v1297 = vsub.f32 %v1281, 1.0
    %v1298 = vsel %vm1218, %v1140, %v1282
    %v1299 = vsel %vm1219, %v1145, %v1283
    %v1300 = vsel %vm1220, %v1150, %v1284
    %v1301 = vsel %vm1221, %v1155, %v1285
    %v1302 = vsel %vm1222, %v1160, %v1286
    %v1303 = vsel %vm1223, %v1165, %v1287
    %v1304 = vsel %vm1224, %v1170, %v1288
    %v1305 = vsel %vm1225, %v1175, %v1289
    %v1306 = vsel %vm1226, %v1180, %v1290
    %v1307 = vsel %vm1227, %v1185, %v1291
    %v1308 = vsel %vm1228, %v1190, %v1292
    %v1309 = vsel %vm1229, %v1195, %v1293
    %v1310 = vsel %vm1230, %v1200, %v1294
    %v1311 = vsel %vm1231, %v1205, %v1295
    %v1312 = vsel %vm1232, %v1210, %v1296
    %v1313 = vsel %vm1233, %v1215, %v1297
    %1314 = vmatprep.subr.mxu0 0.0
    %1315 = vmatpush1.msra.mxu0 %v355
    %1316 = vmatprep.subr.mxu0 0.0
    %1317 = vmatpush1.msra.mxu0 %v356
    %1318 = vmatprep.subr.mxu0 0.0
    %1319 = vmatpush1.msra.mxu0 %v357
    %1320 = vmatprep.subr.mxu0 0.0
    %1321 = vmatpush1.msra.mxu0 %v358
    %1322 = vmatprep.subr.mxu0 0.0
    %1323 = vmatpush1.msra.mxu0 %v359
    %1324 = vmatprep.subr.mxu0 0.0
    %1325 = vmatpush1.msra.mxu0 %v360
    %1326 = vmatprep.subr.mxu0 0.0
    %1327 = vmatpush1.msra.mxu0 %v361
    %1328 = vmatprep.subr.mxu0 0.0
    %1329 = vmatpush1.msra.mxu0 %v362
    %1330 = vmatprep.subr.mxu0 0.0
    %1331 = vmatpush1.msra.mxu0 0.0
    %1332 = vmatprep.subr.mxu0 0.0
    %1333 = vmatpush1.msra.mxu0 0.0
    %1334 = vmatprep.subr.mxu0 0.0
    %1335 = vmatpush1.msra.mxu0 0.0
    %1336 = vmatprep.subr.mxu0 0.0
    %1337 = vmatpush1.msra.mxu0 0.0
    %1338 = vmatprep.subr.mxu0 0.0
    %1339 = vmatpush1.msra.mxu0 0.0
    %1340 = vmatprep.subr.mxu0 0.0
    %1341 = vmatpush1.msra.mxu0 0.0
    %1342 = vmatprep.subr.mxu0 0.0
    %1343 = vmatpush1.msra.mxu0 0.0
    %1344 = vmatprep.subr.mxu0 0.0
    %1345 = vmatpush1.msra.mxu0 0.0
    %1346 = vmatprep.subr.mxu0 0.0
    %1347 = vmatpush1.msra.mxu0 0.0
    %1348 = vmatprep.subr.mxu0 0.0
    %1349 = vmatpush1.msra.mxu0 0.0
    %1350 = vmatprep.subr.mxu0 0.0
    %1351 = vmatpush1.msra.mxu0 0.0
    %1352 = vmatprep.subr.mxu0 0.0
    %1353 = vmatpush1.msra.mxu0 0.0
    %1354 = vmatprep.subr.mxu0 0.0
    %1355 = vmatpush1.msra.mxu0 0.0
    %1356 = vmatprep.subr.mxu0 0.0
    %1357 = vmatpush1.msra.mxu0 0.0
    %1358 = vmatprep.subr.mxu0 0.0
    %1359 = vmatpush1.msra.mxu0 0.0
    %1360 = vmatprep.subr.mxu0 0.0
    %1361 = vmatpush1.msra.mxu0 0.0
    %1362 = vmatprep.subr.mxu0 0.0
    %1363 = vmatpush1.msra.mxu0 0.0
    %1364 = vmatprep.subr.mxu0 0.0
    %1365 = vmatpush1.msra.mxu0 0.0
    %1366 = vmatprep.subr.mxu0 0.0
    %1367 = vmatpush1.msra.mxu0 0.0
    %1368 = vmatprep.subr.mxu0 0.0
    %1369 = vmatpush1.msra.mxu0 0.0
    %1370 = vmatprep.subr.mxu0 0.0
    %1371 = vmatpush1.msra.mxu0 0.0
    %1372 = vmatprep.subr.mxu0 0.0
    %1373 = vmatpush1.msra.mxu0 0.0
    %1374 = vmatprep.subr.mxu0 0.0
    %1375 = vmatpush1.msra.mxu0 0.0
    %1376 = vmatprep.subr.mxu0 0.0
    %1377 = vmatpush1.msra.mxu0 0.0
    %1378 = vmatprep.mubr.f32.mxu0 0.0
    %1379 = vmatmul.mubr.f32.gmra.mrb[0].mxu0 %v721
    %v1380 = vpop.f32.mrb[0].mxu0
    %v1381 = vadd.f32 0.0, %v1380
    %v1382 = vpop.f32.mrb[0].mxu0
    %1383 = vmatprep.mubr.f32.mxu0 0.0
    %1384 = vmatmul.mubr.f32.gmra.mrb[0].mxu0 %v724
    %v1385 = vpop.f32.mrb[0].mxu0
    %v1386 = vadd.f32 0.0, %v1385
    %v1387 = vpop.f32.mrb[0].mxu0
    %1388 = vmatprep.mubr.f32.mxu0 0.0
    %1389 = vmatmul.mubr.f32.gmra.mrb[0].mxu0 %v727
    %v1390 = vpop.f32.mrb[0].mxu0
    %v1391 = vadd.f32 0.0, %v1390
    %v1392 = vpop.f32.mrb[0].mxu0
    %1393 = vmatprep.mubr.f32.mxu0 0.0
    %1394 = vmatmul.mubr.f32.gmra.mrb[0].mxu0 %v730
    %v1395 = vpop.f32.mrb[0].mxu0
    %v1396 = vadd.f32 0.0, %v1395
    %v1397 = vpop.f32.mrb[0].mxu0
    %1398 = vmatprep.mubr.f32.mxu0 0.0
    %1399 = vmatmul.mubr.f32.gmra.mrb[0].mxu0 %v733
    %v1400 = vpop.f32.mrb[0].mxu0
    %v1401 = vadd.f32 0.0, %v1400
    %v1402 = vpop.f32.mrb[0].mxu0
    %1403 = vmatprep.mubr.f32.mxu0 0.0
    %1404 = vmatmul.mubr.f32.gmra.mrb[0].mxu0 %v736
    %v1405 = vpop.f32.mrb[0].mxu0
    %v1406 = vadd.f32 0.0, %v1405
    %v1407 = vpop.f32.mrb[0].mxu0
    %1408 = vmatprep.mubr.f32.mxu0 0.0
    %1409 = vmatmul.mubr.f32.gmra.mrb[0].mxu0 %v739
    %v1410 = vpop.f32.mrb[0].mxu0
    %v1411 = vadd.f32 0.0, %v1410
    %v1412 = vpop.f32.mrb[0].mxu0
    %1413 = vmatprep.mubr.f32.mxu0 0.0
    %1414 = vmatmul.mubr.f32.gmra.mrb[0].mxu0 %v742
    %v1415 = vpop.f32.mrb[0].mxu0
    %v1416 = vadd.f32 0.0, %v1415
    %v1417 = vpop.f32.mrb[0].mxu0
    %1418 = vmatprep.mubr.f32.mxu0 0.0
    %1419 = vmatmul.mubr.f32.gmra.mrb[0].mxu0 %v745
    %v1420 = vpop.f32.mrb[0].mxu0
    %v1421 = vadd.f32 0.0, %v1420
    %v1422 = vpop.f32.mrb[0].mxu0
    %1423 = vmatprep.mubr.f32.mxu0 0.0
    %1424 = vmatmul.mubr.f32.gmra.mrb[0].mxu0 %v748
    %v1425 = vpop.f32.mrb[0].mxu0
    %v1426 = vadd.f32 0.0, %v1425
    %v1427 = vpop.f32.mrb[0].mxu0
    %1428 = vmatprep.mubr.f32.mxu0 0.0
    %1429 = vmatmul.mubr.f32.gmra.mrb[0].mxu0 %v751
    %v1430 = vpop.f32.mrb[0].mxu0
    %v1431 = vadd.f32 0.0, %v1430
    %v1432 = vpop.f32.mrb[0].mxu0
    %1433 = vmatprep.mubr.f32.mxu0 0.0
    %1434 = vmatmul.mubr.f32.gmra.mrb[0].mxu0 %v754
    %v1435 = vpop.f32.mrb[0].mxu0
    %v1436 = vadd.f32 0.0, %v1435
    %v1437 = vpop.f32.mrb[0].mxu0
    %1438 = vmatprep.mubr.f32.mxu0 0.0
    %1439 = vmatmul.mubr.f32.gmra.mrb[0].mxu0 %v757
    %v1440 = vpop.f32.mrb[0].mxu0
    %v1441 = vadd.f32 0.0, %v1440
    %v1442 = vpop.f32.mrb[0].mxu0
    %1443 = vmatprep.mubr.f32.mxu0 0.0
    %1444 = vmatmul.mubr.f32.gmra.mrb[0].mxu0 %v760
    %v1445 = vpop.f32.mrb[0].mxu0
    %v1446 = vadd.f32 0.0, %v1445
    %v1447 = vpop.f32.mrb[0].mxu0
    %1448 = vmatprep.mubr.f32.mxu0 0.0
    %1449 = vmatmul.mubr.f32.gmra.mrb[0].mxu0 %v763
    %v1450 = vpop.f32.mrb[0].mxu0
    %v1451 = vadd.f32 0.0, %v1450
    %v1452 = vpop.f32.mrb[0].mxu0
    %1453 = vmatprep.mubr.f32.mxu0 0.0
    %1454 = vmatmul.mubr.f32.gmra.mrb[0].mxu0 %v766
    %v1455 = vpop.f32.mrb[0].mxu0
    %v1456 = vadd.f32 0.0, %v1455
    %v1457 = vpop.f32.mrb[0].mxu0
    %1458 = vdwg.mxu0
    %vm1459 = vcmask 261120
    %v1461 = vsel %vm1459, %v1298, 0
    %v1464 = vsel %vm1459, %v1299, 0
    %v1467 = vsel %vm1459, %v1300, 0
    %v1470 = vsel %vm1459, %v1301, 0
    %v1473 = vsel %vm1459, %v1302, 0
    %v1476 = vsel %vm1459, %v1303, 0
    %v1479 = vsel %vm1459, %v1304, 0
    %v1482 = vsel %vm1459, %v1305, 0
    %v1485 = vsel %vm1459, %v1306, 0
    %v1488 = vsel %vm1459, %v1307, 0
    %v1491 = vsel %vm1459, %v1308, 0
    %v1494 = vsel %vm1459, %v1309, 0
    %v1497 = vsel %vm1459, %v1310, 0
    %v1500 = vsel %vm1459, %v1311, 0
    %v1503 = vsel %vm1459, %v1312, 0
    %v1506 = vsel %vm1459, %v1313, 0
    %1508 = vmatprep.subr.mxu0 0.0
    %1509 = vmatpush1.msra.mxu0 %v363
    %1510 = vmatprep.subr.mxu0 0.0
    %1511 = vmatpush1.msra.mxu0 %v364
    %1512 = vmatprep.subr.mxu0 0.0
    %1513 = vmatpush1.msra.mxu0 %v365
    %1514 = vmatprep.subr.mxu0 0.0
    %1515 = vmatpush1.msra.mxu0 %v366
    %1516 = vmatprep.subr.mxu0 0.0
    %1517 = vmatpush1.msra.mxu0 0.0
    %1518 = vmatprep.subr.mxu0 0.0
    %1519 = vmatpush1.msra.mxu0 0.0
    %1520 = vmatprep.subr.mxu0 0.0
    %1521 = vmatpush1.msra.mxu0 0.0
    %1522 = vmatprep.subr.mxu0 0.0
    %1523 = vmatpush1.msra.mxu0 0.0
    %1524 = vmatprep.subr.mxu0 0.0
    %1525 = vmatpush1.msra.mxu0 0.0
    %1526 = vmatprep.subr.mxu0 0.0
    %1527 = vmatpush1.msra.mxu0 0.0
    %1528 = vmatprep.subr.mxu0 0.0
    %1529 = vmatpush1.msra.mxu0 0.0
    %1530 = vmatprep.subr.mxu0 0.0
    %1531 = vmatpush1.msra.mxu0 0.0
    %1532 = vmatprep.subr.mxu0 0.0
    %1533 = vmatpush1.msra.mxu0 0.0
    %1534 = vmatprep.subr.mxu0 0.0
    %1535 = vmatpush1.msra.mxu0 0.0
    %1536 = vmatprep.subr.mxu0 0.0
    %1537 = vmatpush1.msra.mxu0 0.0
    %1538 = vmatprep.subr.mxu0 0.0
    %1539 = vmatpush1.msra.mxu0 0.0
    %1540 = vmatprep.subr.mxu0 0.0
    %1541 = vmatpush1.msra.mxu0 0.0
    %1542 = vmatprep.subr.mxu0 0.0
    %1543 = vmatpush1.msra.mxu0 0.0
    %1544 = vmatprep.subr.mxu0 0.0
    %1545 = vmatpush1.msra.mxu0 0.0
    %1546 = vmatprep.subr.mxu0 0.0
    %1547 = vmatpush1.msra.mxu0 0.0
    %1548 = vmatprep.subr.mxu0 0.0
    %1549 = vmatpush1.msra.mxu0 0.0
    %1550 = vmatprep.subr.mxu0 0.0
    %1551 = vmatpush1.msra.mxu0 0.0
    %1552 = vmatprep.subr.mxu0 0.0
    %1553 = vmatpush1.msra.mxu0 0.0
    %1554 = vmatprep.subr.mxu0 0.0
    %1555 = vmatpush1.msra.mxu0 0.0
    %1556 = vmatprep.subr.mxu0 0.0
    %1557 = vmatpush1.msra.mxu0 0.0
    %1558 = vmatprep.subr.mxu0 0.0
    %1559 = vmatpush1.msra.mxu0 0.0
    %1560 = vmatprep.subr.mxu0 0.0
    %1561 = vmatpush1.msra.mxu0 0.0
    %1562 = vmatprep.subr.mxu0 0.0
    %1563 = vmatpush1.msra.mxu0 0.0
    %1564 = vmatprep.subr.mxu0 0.0
    %1565 = vmatpush1.msra.mxu0 0.0
    %1566 = vmatprep.subr.mxu0 0.0
    %1567 = vmatpush1.msra.mxu0 0.0
    %1568 = vmatprep.subr.mxu0 0.0
    %1569 = vmatpush1.msra.mxu0 0.0
    %1570 = vmatprep.subr.mxu0 0.0
    %1571 = vmatpush1.msra.mxu0 0.0
    %1572 = vmatprep.mubr.f32.mxu0 0.0
    %1573 = vmatmul.mubr.f32.gmra.mrb[0].mxu0 %v1461
    %v1574 = vpop.f32.mrb[0].mxu0
    %v1575 = vadd.f32 %v1381, %v1574
    %v1576 = vpop.f32.mrb[0].mxu0
    %1577 = vmatprep.mubr.f32.mxu0 0.0
    %1578 = vmatmul.mubr.f32.gmra.mrb[0].mxu0 %v1464
    %v1579 = vpop.f32.mrb[0].mxu0
    %v1580 = vadd.f32 %v1386, %v1579
    %v1581 = vpop.f32.mrb[0].mxu0
    %1582 = vmatprep.mubr.f32.mxu0 0.0
    %1583 = vmatmul.mubr.f32.gmra.mrb[0].mxu0 %v1467
    %v1584 = vpop.f32.mrb[0].mxu0
    %v1585 = vadd.f32 %v1391, %v1584
    %v1586 = vpop.f32.mrb[0].mxu0
    %1587 = vmatprep.mubr.f32.mxu0 0.0
    %1588 = vmatmul.mubr.f32.gmra.mrb[0].mxu0 %v1470
    %v1589 = vpop.f32.mrb[0].mxu0
    %v1590 = vadd.f32 %v1396, %v1589
    %v1591 = vpop.f32.mrb[0].mxu0
    %1592 = vmatprep.mubr.f32.mxu0 0.0
    %1593 = vmatmul.mubr.f32.gmra.mrb[0].mxu0 %v1473
    %v1594 = vpop.f32.mrb[0].mxu0
    %v1595 = vadd.f32 %v1401, %v1594
    %v1596 = vpop.f32.mrb[0].mxu0
    %1597 = vmatprep.mubr.f32.mxu0 0.0
    %1598 = vmatmul.mubr.f32.gmra.mrb[0].mxu0 %v1476
    %v1599 = vpop.f32.mrb[0].mxu0
    %v1600 = vadd.f32 %v1406, %v1599
    %v1601 = vpop.f32.mrb[0].mxu0
    %1602 = vmatprep.mubr.f32.mxu0 0.0
    %1603 = vmatmul.mubr.f32.gmra.mrb[0].mxu0 %v1479
    %v1604 = vpop.f32.mrb[0].mxu0
    %v1605 = vadd.f32 %v1411, %v1604
    %v1606 = vpop.f32.mrb[0].mxu0
    %1607 = vmatprep.mubr.f32.mxu0 0.0
    %1608 = vmatmul.mubr.f32.gmra.mrb[0].mxu0 %v1482
    %v1609 = vpop.f32.mrb[0].mxu0
    %v1610 = vadd.f32 %v1416, %v1609
    %v1611 = vpop.f32.mrb[0].mxu0
    %1612 = vmatprep.mubr.f32.mxu0 0.0
    %1613 = vmatmul.mubr.f32.gmra.mrb[0].mxu0 %v1485
    %v1614 = vpop.f32.mrb[0].mxu0
    %v1615 = vadd.f32 %v1421, %v1614
    %v1616 = vpop.f32.mrb[0].mxu0
    %1617 = vmatprep.mubr.f32.mxu0 0.0
    %1618 = vmatmul.mubr.f32.gmra.mrb[0].mxu0 %v1488
    %v1619 = vpop.f32.mrb[0].mxu0
    %v1620 = vadd.f32 %v1426, %v1619
    %v1621 = vpop.f32.mrb[0].mxu0
    %1622 = vmatprep.mubr.f32.mxu0 0.0
    %1623 = vmatmul.mubr.f32.gmra.mrb[0].mxu0 %v1491
    %v1624 = vpop.f32.mrb[0].mxu0
    %v1625 = vadd.f32 %v1431, %v1624
    %v1626 = vpop.f32.mrb[0].mxu0
    %1627 = vmatprep.mubr.f32.mxu0 0.0
    %1628 = vmatmul.mubr.f32.gmra.mrb[0].mxu0 %v1494
    %v1629 = vpop.f32.mrb[0].mxu0
    %v1630 = vadd.f32 %v1436, %v1629
    %v1631 = vpop.f32.mrb[0].mxu0
    %1632 = vmatprep.mubr.f32.mxu0 0.0
    %1633 = vmatmul.mubr.f32.gmra.mrb[0].mxu0 %v1497
    %v1634 = vpop.f32.mrb[0].mxu0
    %v1635 = vadd.f32 %v1441, %v1634
    %v1636 = vpop.f32.mrb[0].mxu0
    %1637 = vmatprep.mubr.f32.mxu0 0.0
    %1638 = vmatmul.mubr.f32.gmra.mrb[0].mxu0 %v1500
    %v1639 = vpop.f32.mrb[0].mxu0
    %v1640 = vadd.f32 %v1446, %v1639
    %v1641 = vpop.f32.mrb[0].mxu0
    %1642 = vmatprep.mubr.f32.mxu0 0.0
    %1643 = vmatmul.mubr.f32.gmra.mrb[0].mxu0 %v1503
    %v1644 = vpop.f32.mrb[0].mxu0
    %v1645 = vadd.f32 %v1451, %v1644
    %v1646 = vpop.f32.mrb[0].mxu0
    %1647 = vmatprep.mubr.f32.mxu0 0.0
    %1648 = vmatmul.mubr.f32.gmra.mrb[0].mxu0 %v1506
    %v1649 = vpop.f32.mrb[0].mxu0
    %v1650 = vadd.f32 %v1456, %v1649
    %v1651 = vpop.f32.mrb[0].mxu0
    %1652 = vdwg.mxu0
    %v1653 = vadd.f32 %v1575, %v322
    %v1654 = vadd.f32 %v1580, %v322
    %v1655 = vadd.f32 %v1585, %v322
    %v1656 = vadd.f32 %v1590, %v322
    %v1657 = vadd.f32 %v1595, %v322
    %v1658 = vadd.f32 %v1600, %v322
    %v1659 = vadd.f32 %v1605, %v322
    %v1660 = vadd.f32 %v1610, %v322
    %v1661 = vadd.f32 %v1615, %v322
    %v1662 = vadd.f32 %v1620, %v322
    %v1663 = vadd.f32 %v1625, %v322
    %v1664 = vadd.f32 %v1630, %v322
    %v1665 = vadd.f32 %v1635, %v322
    %v1666 = vadd.f32 %v1640, %v322
    %v1667 = vadd.f32 %v1645, %v322
    %v1668 = vadd.f32 %v1650, %v322
    %1669 = vst [vmem:[%s3] sm:$0xff] %v1653
    %1670 = vst [vmem:[%s3 + $0x8] sm:$0xff] %v1654
    %1671 = vst [vmem:[%s3 + $0x10] sm:$0xff] %v1655
    %1672 = vst [vmem:[%s3 + $0x18] sm:$0xff] %v1656
    %1673 = vst [vmem:[%s3 + $0x20] sm:$0xff] %v1657
    %1674 = vst [vmem:[%s3 + $0x28] sm:$0xff] %v1658
    %1675 = vst [vmem:[%s3 + $0x30] sm:$0xff] %v1659
    %1676 = vst [vmem:[%s3 + $0x38] sm:$0xff] %v1660
    %1677 = vst [vmem:[%s3 + $0x40] sm:$0xff] %v1661
    %1678 = vst [vmem:[%s3 + $0x48] sm:$0xff] %v1662
    %1679 = vst [vmem:[%s3 + $0x50] sm:$0xff] %v1663
    %1680 = vst [vmem:[%s3 + $0x58] sm:$0xff] %v1664
    %1681 = vst [vmem:[%s3 + $0x60] sm:$0xff] %v1665
    %1682 = vst [vmem:[%s3 + $0x68] sm:$0xff] %v1666
    %1683 = vst [vmem:[%s3 + $0x70] sm:$0xff] %v1667
    %1684 = vst [vmem:[%s3 + $0x78] sm:$0xff] %v1668
    // Predicated region
    $region18: #{estnet_forward.1} parent=1 // pred_check
      _
    $region19: #{estnet_forward.1} parent=1 // pred_check_branch
      %1686 = sbr.rel (0) target = $region21
    $region20: #{estnet_forward.1} parent=1 // pred_region
      _
    $region21: #{estnet_forward.1} parent=1 // pred_fallthru
      _
    // Predicated region
    $region22: #{estnet_forward.1} parent=1 // pred_check
      _
    $region23: #{estnet_forward.1} parent=1 // pred_check_branch
      %1688 = sbr.rel (0) target = $region25
    $region24: #{estnet_forward.1} parent=1 // pred_region
      _
    $region25: #{estnet_forward.1} parent=1 // pred_fallthru
      _
    %1689 = vsyncpa [#allocation3], 1

</llo_original>
